<compile_context>
chip_gen: v7x
topology: tpu7x:2x2x1
jax: 0.10.0
libtpu: 0.0.40
codegen_flags: <defaults>
</compile_context>

<pallas_src>
import math

import jax
import jax.numpy as jnp
from jax import lax
from jax.experimental import pallas as pl
from jax.experimental.pallas import tpu as pltpu

# ---------------- small, GQA-flavoured config ----------------
BATCH = 2
SEQ = 8
HIDDEN = 64
NUM_HEADS = 4
NUM_KV_HEADS = 2
HEAD_DIM = HIDDEN // NUM_HEADS          # 16
INTERMEDIATE = 128
ROPE_THETA = 10000.0
RMS_EPS = 1e-6
N_REP = NUM_HEADS // NUM_KV_HEADS       # 2
DTYPE = jnp.float32

QKV_DIM = (NUM_HEADS + 2 * NUM_KV_HEADS) * HEAD_DIM      # 128  (q|k|v packed)
GU_DIM = 2 * INTERMEDIATE                                # 256  (gate|up packed)


# ---------------- the fused decoder-layer kernel ----------------
def decoder_layer_kernel(x_ref, cos_ref, sin_ref, w_in_ref, w_post_ref,
                         wqkv_ref, wo_ref, wgu_ref, wd_ref, o_ref):
    # blocks: x/o (1, S, H); cos/sin (1, S, D); weights are full arrays.
    x = x_ref[0].astype(jnp.float32)                      # (S, H)
    cos = cos_ref[0].astype(jnp.float32)                  # (S, D)
    sin = sin_ref[0].astype(jnp.float32)

    S, D = cos.shape

    # ---- input RMSNorm (f32) ----
    var = jnp.mean(x * x, axis=-1, keepdims=True)
    h = x * lax.rsqrt(var + RMS_EPS) * w_in_ref[...].astype(jnp.float32)

    # ---- fused QKV projection: (S, H) @ (H, (Hq+2*Hkv)*D) ----
    qkv = jnp.dot(h, wqkv_ref[...].astype(h.dtype),
                  preferred_element_type=jnp.float32)     # (S, QKV_DIM)

    # ---- RoPE helpers (hoisted out of all loops) ----
    lane = lax.broadcasted_iota(jnp.int32, (1, D), 1)
    sign = jnp.where(lane < D // 2, -1.0, 1.0).astype(jnp.float32)
    ssin = sign * sin                                    # sign-folded sin
    scale = 1.0 / math.sqrt(D)
    cos_q = cos * scale                                  # fold 1/sqrt(D) into
    ssin_q = ssin * scale                                #   the query RoPE

    def rope_k(t):   # rotate_half(t) == sign * roll(t, D//2, lanes)
        return t * cos + pltpu.roll(t, D // 2, 1) * ssin

    def rope_q(t):   # RoPE with the attention scale pre-applied
        return t * cos_q + pltpu.roll(t, D // 2, 1) * ssin_q

    # ---- causal mask for a group-stacked score block (N_REP*S, S) ----
    row = lax.broadcasted_iota(jnp.int32, (N_REP * S, S), 0) % S
    col = lax.broadcasted_iota(jnp.int32, (N_REP * S, S), 1)
    causal = col <= row
    neg_inf = jnp.float32(-jnp.inf)

    k_off = NUM_HEADS * D
    v_off = (NUM_HEADS + NUM_KV_HEADS) * D

    # ---- attention: one score/softmax/PV block per KV group ----
    attn_heads = [None] * NUM_HEADS
    for g in range(NUM_KV_HEADS):
        kg = rope_k(qkv[:, k_off + g * D: k_off + (g + 1) * D])   # (S, D)
        vg = qkv[:, v_off + g * D: v_off + (g + 1) * D]           # (S, D)
        # Stack the N_REP query heads sharing this KV head along sublanes.
        q_stack = jnp.concatenate(
            [rope_q(qkv[:, (g * N_REP + r) * D:(g * N_REP + r + 1) * D])
             for r in range(N_REP)], axis=0)                      # (N_REP*S, D)
        s = jnp.dot(q_stack, kg.T,
                    preferred_element_type=jnp.float32)           # (N_REP*S, S)
        s = jnp.where(causal, s, neg_inf)
        m = jnp.max(s, axis=-1, keepdims=True)
        p = jnp.exp(s - m)
        p = p * pl.reciprocal(jnp.sum(p, axis=-1, keepdims=True), approx=True)
        og = jnp.dot(p, vg, preferred_element_type=jnp.float32)   # (N_REP*S, D)
        for r in range(N_REP):
            attn_heads[g * N_REP + r] = og[r * S:(r + 1) * S]     # (S, D) each
    attn = jnp.concatenate(attn_heads, axis=-1)                   # (S, H)

    # ---- o_proj + residual (fused epilogue) ----
    h1 = x + jnp.dot(attn, wo_ref[...].astype(jnp.float32),
                     preferred_element_type=jnp.float32)          # (S, H)

    # ---- post-attention RMSNorm ----
    var2 = jnp.mean(h1 * h1, axis=-1, keepdims=True)
    h2 = h1 * lax.rsqrt(var2 + RMS_EPS) * w_post_ref[...].astype(jnp.float32)

    # ---- fused gate/up projection + SwiGLU + down_proj + residual ----
    gu = jnp.dot(h2, wgu_ref[...].astype(h2.dtype),
                 preferred_element_type=jnp.float32)              # (S, 2I)
    gate = gu[:, :INTERMEDIATE]
    up = gu[:, INTERMEDIATE:]
    inter = jax.nn.silu(gate) * up
    out = h1 + jnp.dot(inter, wd_ref[...].astype(jnp.float32),
                       preferred_element_type=jnp.float32)        # (S, H)

    o_ref[0] = out.astype(o_ref.dtype)


# ---------------- pallas wrapper ----------------
def llama_decoder_layer(hidden_states, params, position_ids):
    B, S, H = hidden_states.shape
    cos, sin = rope_cos_sin(position_ids, HEAD_DIM, ROPE_THETA,
                            hidden_states.dtype)                  # (B, S, D)

    # One-time weight packing (in a real model these would be pre-fused).
    wqkv = jnp.concatenate([params["wq"], params["wk"], params["wv"]], axis=1)
    wgu = jnp.concatenate([params["w_gate"], params["w_up"]], axis=1)

    def full_spec(shape):
        return pl.BlockSpec(shape, lambda b: (0,) * len(shape))

    return pl.pallas_call(
        decoder_layer_kernel,
        out_shape=jax.ShapeDtypeStruct((B, S, H), hidden_states.dtype),
        grid=(B,),
        in_specs=[
            pl.BlockSpec((1, S, H), lambda b: (b, 0, 0)),          # x
            pl.BlockSpec((1, S, HEAD_DIM), lambda b: (b, 0, 0)),   # cos
            pl.BlockSpec((1, S, HEAD_DIM), lambda b: (b, 0, 0)),   # sin
            full_spec((1, H)),                                     # input_ln w
            full_spec((1, H)),                                     # post_ln w
            full_spec((H, QKV_DIM)),                               # packed QKV
            full_spec((H, H)),                                     # o_proj
            full_spec((H, GU_DIM)),                                # packed gate|up
            full_spec((INTERMEDIATE, H)),                          # down_proj
        ],
        out_specs=pl.BlockSpec((1, S, H), lambda b: (b, 0, 0)),
        compiler_params=pltpu.CompilerParams(
            dimension_semantics=("parallel",),
        ),
    )(hidden_states, cos, sin, params["input_ln"], params["post_ln"],
      wqkv, params["wo"], wgu, params["w_down"])


# ---------------- rope table (glue, plain JAX — mirrors LlamaRotaryEmbedding) ----------------
def rope_cos_sin(position_ids, head_dim, theta, dtype):
    inv_freq = 1.0 / (
        theta ** (jnp.arange(0, head_dim, 2, dtype=jnp.float32) / head_dim)
    )
    freqs = position_ids.astype(jnp.float32)[:, :, None] * inv_freq[None, None, :]
    emb = jnp.concatenate([freqs, freqs], axis=-1)                # (B, S, D)
    return jnp.cos(emb).astype(dtype), jnp.sin(emb).astype(dtype)


# ---------------- pure-JAX reference (for verification) ----------------
def reference(hidden_states, params, position_ids):
    def rms(x, w):
        xf = x.astype(jnp.float32)
        var = jnp.mean(xf * xf, axis=-1, keepdims=True)
        return (w.reshape(-1) * (xf * lax.rsqrt(var + RMS_EPS))).astype(x.dtype)

    def rotate_half(x):
        x1, x2 = x[..., : HEAD_DIM // 2], x[..., HEAD_DIM // 2:]
        return jnp.concatenate([-x2, x1], axis=-1)

    B, S, H = hidden_states.shape
    residual = hidden_states
    h = rms(hidden_states, params["input_ln"])
    q = (h @ params["wq"]).reshape(B, S, NUM_HEADS, HEAD_DIM).transpose(0, 2, 1, 3)
    k = (h @ params["wk"]).reshape(B, S, NUM_KV_HEADS, HEAD_DIM).transpose(0, 2, 1, 3)
    v = (h @ params["wv"]).reshape(B, S, NUM_KV_HEADS, HEAD_DIM).transpose(0, 2, 1, 3)
    cos, sin = rope_cos_sin(position_ids, HEAD_DIM, ROPE_THETA, hidden_states.dtype)
    cos_e, sin_e = cos[:, None], sin[:, None]
    q = q * cos_e + rotate_half(q) * sin_e
    k = k * cos_e + rotate_half(k) * sin_e
    k = jnp.repeat(k, N_REP, axis=1)
    v = jnp.repeat(v, N_REP, axis=1)
    scores = jnp.einsum("bhqd,bhkd->bhqk", q, k) / math.sqrt(HEAD_DIM)
    mask = jnp.tril(jnp.ones((S, S), bool))
    scores = jnp.where(mask[None, None], scores, -jnp.inf)
    p = jax.nn.softmax(scores, axis=-1)
    attn = jnp.einsum("bhqk,bhkd->bhqd", p, v)
    attn = attn.transpose(0, 2, 1, 3).reshape(B, S, H)
    h1 = residual + attn @ params["wo"]
    h2 = rms(h1, params["post_ln"])
    g = h2 @ params["w_gate"]
    u = h2 @ params["w_up"]
    return h1 + (jax.nn.silu(g) * u) @ params["w_down"]


# ---------------- main ----------------
if __name__ == "__main__":
    key = jax.random.PRNGKey(0)
    ks = jax.random.split(key, 8)
    s = 0.02
    params = {
        "input_ln": jnp.ones((1, HIDDEN), DTYPE),
        "post_ln": jnp.ones((1, HIDDEN), DTYPE),
        # nn.Linear weights are (out, in); stored here already transposed to (in, out)
        "wq": jax.random.normal(ks[0], (HIDDEN, NUM_HEADS * HEAD_DIM), DTYPE) * s,
        "wk": jax.random.normal(ks[1], (HIDDEN, NUM_KV_HEADS * HEAD_DIM), DTYPE) * s,
        "wv": jax.random.normal(ks[2], (HIDDEN, NUM_KV_HEADS * HEAD_DIM), DTYPE) * s,
        "wo": jax.random.normal(ks[3], (NUM_HEADS * HEAD_DIM, HIDDEN), DTYPE) * s,
        "w_gate": jax.random.normal(ks[4], (HIDDEN, INTERMEDIATE), DTYPE) * s,
        "w_up": jax.random.normal(ks[5], (HIDDEN, INTERMEDIATE), DTYPE) * s,
        "w_down": jax.random.normal(ks[6], (INTERMEDIATE, HIDDEN), DTYPE) * s,
    }
    x = jax.random.normal(ks[7], (BATCH, SEQ, HIDDEN), DTYPE)
    position_ids = jnp.broadcast_to(
        jnp.arange(SEQ, dtype=jnp.int32)[None], (BATCH, SEQ))

    out = llama_decoder_layer(x, params, position_ids)
    out = jax.block_until_ready(out)

    ref = reference(x, params, position_ids)
    assert out.shape == (BATCH, SEQ, HIDDEN)
    assert jnp.allclose(out, ref, rtol=2e-2, atol=2e-2), "mismatch vs reference"

    print("KERNEL_OK")
</pallas_src>

<mosaic_0001>
module attributes {stable_mosaic.version = 11 : i64} {
  func.func @decoder_layer_kernel(%arg0: i32, %arg1: memref<1x8x64xf32, #tpu.memory_space<vmem>>, %arg2: memref<1x8x16xf32, #tpu.memory_space<vmem>>, %arg3: memref<1x8x16xf32, #tpu.memory_space<vmem>>, %arg4: memref<1x64xf32, #tpu.memory_space<vmem>>, %arg5: memref<1x64xf32, #tpu.memory_space<vmem>>, %arg6: memref<64x128xf32, #tpu.memory_space<vmem>>, %arg7: memref<64x64xf32, #tpu.memory_space<vmem>>, %arg8: memref<64x256xf32, #tpu.memory_space<vmem>>, %arg9: memref<128x64xf32, #tpu.memory_space<vmem>>, %arg10: memref<1x8x64xf32, #tpu.memory_space<vmem>>) attributes {dimension_semantics = [#tpu.dimension_semantics<parallel>], iteration_bounds = array<i64: 2>, scalar_prefetch = 0 : i64, scratch_operands = 0 : i64, tpu.core_type = #tpu.core_type<tc>, window_params = [{transform_indices = @transform_0, window_bounds = array<i64: 1, 8, 64>}, {transform_indices = @transform_1, window_bounds = array<i64: 1, 8, 16>}, {transform_indices = @transform_2, window_bounds = array<i64: 1, 8, 16>}, {pipeline_mode = #tpu.pipeline_mode<synchronous>, transform_indices = @transform_3, window_bounds = array<i64: 1, 64>}, {pipeline_mode = #tpu.pipeline_mode<synchronous>, transform_indices = @transform_4, window_bounds = array<i64: 1, 64>}, {pipeline_mode = #tpu.pipeline_mode<synchronous>, transform_indices = @transform_5, window_bounds = array<i64: 64, 128>}, {pipeline_mode = #tpu.pipeline_mode<synchronous>, transform_indices = @transform_6, window_bounds = array<i64: 64, 64>}, {pipeline_mode = #tpu.pipeline_mode<synchronous>, transform_indices = @transform_7, window_bounds = array<i64: 64, 256>}, {pipeline_mode = #tpu.pipeline_mode<synchronous>, transform_indices = @transform_8, window_bounds = array<i64: 128, 64>}, {transform_indices = @transform_9, window_bounds = array<i64: 1, 8, 64>}]} {
    %c0 = arith.constant 0 : index
    %c0_0 = arith.constant 0 : index
    %c0_1 = arith.constant 0 : index
    %0 = vector.load %arg1[%c0, %c0_0, %c0_1] : memref<1x8x64xf32, #tpu.memory_space<vmem>>, vector<1x8x64xf32>
    %1 = vector.shape_cast %0 : vector<1x8x64xf32> to vector<8x64xf32>
    %c0_2 = arith.constant 0 : index
    %c0_3 = arith.constant 0 : index
    %c0_4 = arith.constant 0 : index
    %2 = vector.load %arg2[%c0_2, %c0_3, %c0_4] : memref<1x8x16xf32, #tpu.memory_space<vmem>>, vector<1x8x16xf32>
    %3 = vector.shape_cast %2 : vector<1x8x16xf32> to vector<8x16xf32>
    %c0_5 = arith.constant 0 : index
    %c0_6 = arith.constant 0 : index
    %c0_7 = arith.constant 0 : index
    %4 = vector.load %arg3[%c0_5, %c0_6, %c0_7] : memref<1x8x16xf32, #tpu.memory_space<vmem>>, vector<1x8x16xf32>
    %5 = vector.shape_cast %4 : vector<1x8x16xf32> to vector<8x16xf32>
    %6 = arith.mulf %1, %1 : vector<8x64xf32>
    %cst = arith.constant dense<0.000000e+00> : vector<8xf32>
    %7 = vector.multi_reduction <add>, %6, %cst [1] : vector<8x64xf32> to vector<8xf32>
    %8 = vector.shape_cast %7 : vector<8xf32> to vector<8x1xf32>
    %cst_8 = arith.constant 6.400000e+01 : f32
    %9 = vector.broadcast %cst_8 : f32 to vector<8x1xf32>
    %10 = arith.divf %8, %9 : vector<8x1xf32>
    %cst_9 = arith.constant 9.99999997E-7 : f32
    %11 = vector.broadcast %cst_9 : f32 to vector<8x1xf32>
    %12 = arith.addf %10, %11 : vector<8x1xf32>
    %13 = math.rsqrt %12 : vector<8x1xf32>
    %14 = vector.broadcast %13 : vector<8x1xf32> to vector<8x64xf32>
    %15 = arith.mulf %1, %14 : vector<8x64xf32>
    %c0_10 = arith.constant 0 : index
    %c0_11 = arith.constant 0 : index
    %16 = vector.load %arg4[%c0_10, %c0_11] : memref<1x64xf32, #tpu.memory_space<vmem>>, vector<1x64xf32>
    %17 = vector.broadcast %16 : vector<1x64xf32> to vector<8x64xf32>
    %18 = arith.mulf %15, %17 : vector<8x64xf32>
    %c0_12 = arith.constant 0 : index
    %c0_13 = arith.constant 0 : index
    %19 = vector.load %arg6[%c0_12, %c0_13] : memref<64x128xf32, #tpu.memory_space<vmem>>, vector<64x128xf32>
    %cst_14 = arith.constant dense<0.000000e+00> : vector<8x128xf32>
    %20 = tpu.matmul %18, %19, %cst_14 {dimension_numbers = #tpu.dot_dimension_numbers<[1], [0], [0], [1], [0, 0, 1, 1], [], []>} : vector<8x64xf32>, vector<64x128xf32>, vector<8x128xf32> -> vector<8x128xf32>
    %21 = tpu.iota {dimensions = array<i32: 1>} : vector<1x16xi32>
    %c8_i32 = arith.constant 8 : i32
    %22 = vector.broadcast %c8_i32 : i32 to vector<1x16xi32>
    %23 = arith.cmpi slt, %21, %22 : vector<1x16xi32>
    %cst_15 = arith.constant -1.000000e+00 : f32
    %cst_16 = arith.constant 1.000000e+00 : f32
    %24 = vector.broadcast %cst_15 : f32 to vector<1x16xf32>
    %25 = vector.broadcast %cst_16 : f32 to vector<1x16xf32>
    %26 = arith.select %23, %24, %25 : vector<1x16xi1>, vector<1x16xf32>
    %27 = vector.broadcast %26 : vector<1x16xf32> to vector<8x16xf32>
    %28 = arith.mulf %27, %5 : vector<8x16xf32>
    %cst_17 = arith.constant 2.500000e-01 : f32
    %29 = vector.broadcast %cst_17 : f32 to vector<8x16xf32>
    %30 = arith.mulf %3, %29 : vector<8x16xf32>
    %cst_18 = arith.constant 2.500000e-01 : f32
    %31 = vector.broadcast %cst_18 : f32 to vector<8x16xf32>
    %32 = arith.mulf %28, %31 : vector<8x16xf32>
    %33 = tpu.iota {dimensions = array<i32: 0>} : vector<16x8xi32>
    %c8_i32_19 = arith.constant 8 : i32
    %c0_i32 = arith.constant 0 : i32
    %34 = arith.cmpi eq, %c8_i32_19, %c0_i32 : i32
    %c1_i32 = arith.constant 1 : i32
    %35 = arith.select %34, %c1_i32, %c8_i32_19 : i32
    %36 = vector.broadcast %35 : i32 to vector<16x8xi32>
    %37 = arith.remsi %33, %36 : vector<16x8xi32>
    %c0_i32_20 = arith.constant 0 : i32
    %38 = vector.broadcast %c0_i32_20 : i32 to vector<16x8xi32>
    %39 = arith.cmpi ne, %37, %38 : vector<16x8xi32>
    %c0_i32_21 = arith.constant 0 : i32
    %40 = vector.broadcast %c0_i32_21 : i32 to vector<16x8xi32>
    %41 = arith.cmpi slt, %37, %40 : vector<16x8xi32>
    %c0_i32_22 = arith.constant 0 : i32
    %42 = arith.cmpi slt, %35, %c0_i32_22 : i32
    %43 = vector.broadcast %42 : i1 to vector<16x8xi1>
    %44 = vector.broadcast %43 : vector<16x8xi1> to vector<16x8xi1>
    %45 = arith.xori %41, %44 : vector<16x8xi1>
    %46 = arith.andi %45, %39 : vector<16x8xi1>
    %47 = vector.broadcast %35 : i32 to vector<16x8xi32>
    %48 = arith.addi %37, %47 : vector<16x8xi32>
    %49 = arith.select %46, %48, %37 : vector<16x8xi1>, vector<16x8xi32>
    %50 = tpu.iota {dimensions = array<i32: 1>} : vector<16x8xi32>
    %51 = arith.cmpi sle, %50, %49 : vector<16x8xi32>
    %52 = vector.extract_strided_slice %20 {offsets = [0, 64], sizes = [8, 16], strides = [1, 1]} : vector<8x128xf32> to vector<8x16xf32>
    %53 = arith.mulf %52, %3 : vector<8x16xf32>
    %c8_i32_23 = arith.constant 8 : i32
    %54 = tpu.dynamic_rotate %52 by %c8_i32_23 dim 1 : vector<8x16xf32>, i32 -> vector<8x16xf32>
    %55 = arith.mulf %54, %28 : vector<8x16xf32>
    %56 = arith.addf %53, %55 : vector<8x16xf32>
    %57 = vector.extract_strided_slice %20 {offsets = [0, 96], sizes = [8, 16], strides = [1, 1]} : vector<8x128xf32> to vector<8x16xf32>
    %58 = vector.extract_strided_slice %20 {offsets = [0, 0], sizes = [8, 16], strides = [1, 1]} : vector<8x128xf32> to vector<8x16xf32>
    %59 = arith.mulf %58, %30 : vector<8x16xf32>
    %c8_i32_24 = arith.constant 8 : i32
    %60 = tpu.dynamic_rotate %58 by %c8_i32_24 dim 1 : vector<8x16xf32>, i32 -> vector<8x16xf32>
    %61 = arith.mulf %60, %32 : vector<8x16xf32>
    %62 = arith.addf %59, %61 : vector<8x16xf32>
    %63 = vector.extract_strided_slice %20 {offsets = [0, 16], sizes = [8, 16], strides = [1, 1]} : vector<8x128xf32> to vector<8x16xf32>
    %64 = arith.mulf %63, %30 : vector<8x16xf32>
    %c8_i32_25 = arith.constant 8 : i32
    %65 = tpu.dynamic_rotate %63 by %c8_i32_25 dim 1 : vector<8x16xf32>, i32 -> vector<8x16xf32>
    %66 = arith.mulf %65, %32 : vector<8x16xf32>
    %67 = arith.addf %64, %66 : vector<8x16xf32>
    %68 = tpu.concatenate %62, %67 in 0 : vector<8x16xf32>, vector<8x16xf32> -> vector<16x16xf32>
    %69 = tpu.transpose %56, [1, 0] : vector<8x16xf32> -> vector<16x8xf32>
    %cst_26 = arith.constant dense<0.000000e+00> : vector<16x8xf32>
    %70 = tpu.matmul %68, %69, %cst_26 {dimension_numbers = #tpu.dot_dimension_numbers<[1], [0], [0], [1], [0, 0, 1, 1], [], []>} : vector<16x16xf32>, vector<16x8xf32>, vector<16x8xf32> -> vector<16x8xf32>
    %cst_27 = arith.constant 0xFF800000 : f32
    %71 = vector.broadcast %cst_27 : f32 to vector<16x8xf32>
    %72 = arith.select %51, %70, %71 : vector<16x8xi1>, vector<16x8xf32>
    %cst_28 = arith.constant dense<0xFF800000> : vector<16xf32>
    %73 = vector.multi_reduction <maximumf>, %72, %cst_28 [1] : vector<16x8xf32> to vector<16xf32>
    %74 = vector.shape_cast %73 : vector<16xf32> to vector<16x1xf32>
    %75 = vector.broadcast %74 : vector<16x1xf32> to vector<16x8xf32>
    %76 = arith.subf %72, %75 : vector<16x8xf32>
    %77 = math.exp %76 : vector<16x8xf32>
    %cst_29 = arith.constant dense<0.000000e+00> : vector<16xf32>
    %78 = vector.multi_reduction <add>, %77, %cst_29 [1] : vector<16x8xf32> to vector<16xf32>
    %79 = vector.shape_cast %78 : vector<16xf32> to vector<16x1xf32>
    %80 = tpu.reciprocal %79 {approx = true} : vector<16x1xf32> -> vector<16x1xf32>
    %81 = vector.broadcast %80 : vector<16x1xf32> to vector<16x8xf32>
    %82 = arith.mulf %77, %81 : vector<16x8xf32>
    %cst_30 = arith.constant dense<0.000000e+00> : vector<16x16xf32>
    %83 = tpu.matmul %82, %57, %cst_30 {dimension_numbers = #tpu.dot_dimension_numbers<[1], [0], [0], [1], [0, 0, 1, 1], [], []>} : vector<16x8xf32>, vector<8x16xf32>, vector<16x16xf32> -> vector<16x16xf32>
    %84 = vector.extract_strided_slice %83 {offsets = [0, 0], sizes = [8, 16], strides = [1, 1]} : vector<16x16xf32> to vector<8x16xf32>
    %85 = vector.extract_strided_slice %83 {offsets = [8, 0], sizes = [8, 16], strides = [1, 1]} : vector<16x16xf32> to vector<8x16xf32>
    %86 = vector.extract_strided_slice %20 {offsets = [0, 80], sizes = [8, 16], strides = [1, 1]} : vector<8x128xf32> to vector<8x16xf32>
    %87 = arith.mulf %86, %3 : vector<8x16xf32>
    %c8_i32_31 = arith.constant 8 : i32
    %88 = tpu.dynamic_rotate %86 by %c8_i32_31 dim 1 : vector<8x16xf32>, i32 -> vector<8x16xf32>
    %89 = arith.mulf %88, %28 : vector<8x16xf32>
    %90 = arith.addf %87, %89 : vector<8x16xf32>
    %91 = vector.extract_strided_slice %20 {offsets = [0, 112], sizes = [8, 16], strides = [1, 1]} : vector<8x128xf32> to vector<8x16xf32>
    %92 = vector.extract_strided_slice %20 {offsets = [0, 32], sizes = [8, 16], strides = [1, 1]} : vector<8x128xf32> to vector<8x16xf32>
    %93 = arith.mulf %92, %30 : vector<8x16xf32>
    %c8_i32_32 = arith.constant 8 : i32
    %94 = tpu.dynamic_rotate %92 by %c8_i32_32 dim 1 : vector<8x16xf32>, i32 -> vector<8x16xf32>
    %95 = arith.mulf %94, %32 : vector<8x16xf32>
    %96 = arith.addf %93, %95 : vector<8x16xf32>
    %97 = vector.extract_strided_slice %20 {offsets = [0, 48], sizes = [8, 16], strides = [1, 1]} : vector<8x128xf32> to vector<8x16xf32>
    %98 = arith.mulf %97, %30 : vector<8x16xf32>
    %c8_i32_33 = arith.constant 8 : i32
    %99 = tpu.dynamic_rotate %97 by %c8_i32_33 dim 1 : vector<8x16xf32>, i32 -> vector<8x16xf32>
    %100 = arith.mulf %99, %32 : vector<8x16xf32>
    %101 = arith.addf %98, %100 : vector<8x16xf32>
    %102 = tpu.concatenate %96, %101 in 0 : vector<8x16xf32>, vector<8x16xf32> -> vector<16x16xf32>
    %103 = tpu.transpose %90, [1, 0] : vector<8x16xf32> -> vector<16x8xf32>
    %cst_34 = arith.constant dense<0.000000e+00> : vector<16x8xf32>
    %104 = tpu.matmul %102, %103, %cst_34 {dimension_numbers = #tpu.dot_dimension_numbers<[1], [0], [0], [1], [0, 0, 1, 1], [], []>} : vector<16x16xf32>, vector<16x8xf32>, vector<16x8xf32> -> vector<16x8xf32>
    %cst_35 = arith.constant 0xFF800000 : f32
    %105 = vector.broadcast %cst_35 : f32 to vector<16x8xf32>
    %106 = arith.select %51, %104, %105 : vector<16x8xi1>, vector<16x8xf32>
    %cst_36 = arith.constant dense<0xFF800000> : vector<16xf32>
    %107 = vector.multi_reduction <maximumf>, %106, %cst_36 [1] : vector<16x8xf32> to vector<16xf32>
    %108 = vector.shape_cast %107 : vector<16xf32> to vector<16x1xf32>
    %109 = vector.broadcast %108 : vector<16x1xf32> to vector<16x8xf32>
    %110 = arith.subf %106, %109 : vector<16x8xf32>
    %111 = math.exp %110 : vector<16x8xf32>
    %cst_37 = arith.constant dense<0.000000e+00> : vector<16xf32>
    %112 = vector.multi_reduction <add>, %111, %cst_37 [1] : vector<16x8xf32> to vector<16xf32>
    %113 = vector.shape_cast %112 : vector<16xf32> to vector<16x1xf32>
    %114 = tpu.reciprocal %113 {approx = true} : vector<16x1xf32> -> vector<16x1xf32>
    %115 = vector.broadcast %114 : vector<16x1xf32> to vector<16x8xf32>
    %116 = arith.mulf %111, %115 : vector<16x8xf32>
    %cst_38 = arith.constant dense<0.000000e+00> : vector<16x16xf32>
    %117 = tpu.matmul %116, %91, %cst_38 {dimension_numbers = #tpu.dot_dimension_numbers<[1], [0], [0], [1], [0, 0, 1, 1], [], []>} : vector<16x8xf32>, vector<8x16xf32>, vector<16x16xf32> -> vector<16x16xf32>
    %118 = vector.extract_strided_slice %117 {offsets = [0, 0], sizes = [8, 16], strides = [1, 1]} : vector<16x16xf32> to vector<8x16xf32>
    %119 = vector.extract_strided_slice %117 {offsets = [8, 0], sizes = [8, 16], strides = [1, 1]} : vector<16x16xf32> to vector<8x16xf32>
    %120 = tpu.concatenate %84, %85, %118, %119 in 1 : vector<8x16xf32>, vector<8x16xf32>, vector<8x16xf32>, vector<8x16xf32> -> vector<8x64xf32>
    %c0_39 = arith.constant 0 : index
    %c0_40 = arith.constant 0 : index
    %121 = vector.load %arg7[%c0_39, %c0_40] : memref<64x64xf32, #tpu.memory_space<vmem>>, vector<64x64xf32>
    %cst_41 = arith.constant dense<0.000000e+00> : vector<8x64xf32>
    %122 = tpu.matmul %120, %121, %cst_41 {dimension_numbers = #tpu.dot_dimension_numbers<[1], [0], [0], [1], [0, 0, 1, 1], [], []>} : vector<8x64xf32>, vector<64x64xf32>, vector<8x64xf32> -> vector<8x64xf32>
    %123 = arith.addf %1, %122 : vector<8x64xf32>
    %124 = arith.mulf %123, %123 : vector<8x64xf32>
    %cst_42 = arith.constant dense<0.000000e+00> : vector<8xf32>
    %125 = vector.multi_reduction <add>, %124, %cst_42 [1] : vector<8x64xf32> to vector<8xf32>
    %126 = vector.shape_cast %125 : vector<8xf32> to vector<8x1xf32>
    %cst_43 = arith.constant 6.400000e+01 : f32
    %127 = vector.broadcast %cst_43 : f32 to vector<8x1xf32>
    %128 = arith.divf %126, %127 : vector<8x1xf32>
    %cst_44 = arith.constant 9.99999997E-7 : f32
    %129 = vector.broadcast %cst_44 : f32 to vector<8x1xf32>
    %130 = arith.addf %128, %129 : vector<8x1xf32>
    %131 = math.rsqrt %130 : vector<8x1xf32>
    %132 = vector.broadcast %131 : vector<8x1xf32> to vector<8x64xf32>
    %133 = arith.mulf %123, %132 : vector<8x64xf32>
    %c0_45 = arith.constant 0 : index
    %c0_46 = arith.constant 0 : index
    %134 = vector.load %arg5[%c0_45, %c0_46] : memref<1x64xf32, #tpu.memory_space<vmem>>, vector<1x64xf32>
    %135 = vector.broadcast %134 : vector<1x64xf32> to vector<8x64xf32>
    %136 = arith.mulf %133, %135 : vector<8x64xf32>
    %c0_47 = arith.constant 0 : index
    %c0_48 = arith.constant 0 : index
    %137 = vector.load %arg8[%c0_47, %c0_48] : memref<64x256xf32, #tpu.memory_space<vmem>>, vector<64x256xf32>
    %cst_49 = arith.constant dense<0.000000e+00> : vector<8x256xf32>
    %138 = tpu.matmul %136, %137, %cst_49 {dimension_numbers = #tpu.dot_dimension_numbers<[1], [0], [0], [1], [0, 0, 1, 1], [], []>} : vector<8x64xf32>, vector<64x256xf32>, vector<8x256xf32> -> vector<8x256xf32>
    %139 = vector.extract_strided_slice %138 {offsets = [0, 0], sizes = [8, 128], strides = [1, 1]} : vector<8x256xf32> to vector<8x128xf32>
    %140 = vector.extract_strided_slice %138 {offsets = [0, 128], sizes = [8, 128], strides = [1, 1]} : vector<8x256xf32> to vector<8x128xf32>
    %141 = arith.negf %139 : vector<8x128xf32>
    %142 = math.exp %141 : vector<8x128xf32>
    %cst_50 = arith.constant 1.000000e+00 : f32
    %143 = vector.broadcast %cst_50 : f32 to vector<8x128xf32>
    %144 = arith.addf %143, %142 : vector<8x128xf32>
    %145 = arith.divf %143, %144 : vector<8x128xf32>
    %146 = arith.mulf %139, %145 : vector<8x128xf32>
    %147 = arith.mulf %146, %140 : vector<8x128xf32>
    %c0_51 = arith.constant 0 : index
    %c0_52 = arith.constant 0 : index
    %148 = vector.load %arg9[%c0_51, %c0_52] : memref<128x64xf32, #tpu.memory_space<vmem>>, vector<128x64xf32>
    %cst_53 = arith.constant dense<0.000000e+00> : vector<8x64xf32>
    %149 = tpu.matmul %147, %148, %cst_53 {dimension_numbers = #tpu.dot_dimension_numbers<[1], [0], [0], [1], [0, 0, 1, 1], [], []>} : vector<8x128xf32>, vector<128x64xf32>, vector<8x64xf32> -> vector<8x64xf32>
    %150 = arith.addf %123, %149 : vector<8x64xf32>
    %c0_54 = arith.constant 0 : index
    %c0_55 = arith.constant 0 : index
    %c0_56 = arith.constant 0 : index
    %151 = vector.load %arg10[%c0_54, %c0_55, %c0_56] : memref<1x8x64xf32, #tpu.memory_space<vmem>>, vector<1x8x64xf32>
    %152 = vector.shape_cast %151 : vector<1x8x64xf32> to vector<8x64xf32>
    %153 = vector.shape_cast %150 : vector<8x64xf32> to vector<1x8x64xf32>
    tpu.vector_store %arg10[%c0_54, %c0_55, %c0_56], %153 {strides = array<i32>} : memref<1x8x64xf32, #tpu.memory_space<vmem>>, vector<1x8x64xf32>,
    return
  }
  func.func @transform_0(%arg0: i32) -> (i32, i32, i32) {
    %c0_i32 = arith.constant 0 : i32
    %c0_i32_0 = arith.constant 0 : i32
    %c0_i32_1 = arith.constant 0 : i32
    return %arg0, %c0_i32, %c0_i32_0 : i32, i32, i32
  }
  func.func @transform_1(%arg0: i32) -> (i32, i32, i32) {
    %c0_i32 = arith.constant 0 : i32
    %c0_i32_0 = arith.constant 0 : i32
    %c0_i32_1 = arith.constant 0 : i32
    return %arg0, %c0_i32, %c0_i32_0 : i32, i32, i32
  }
  func.func @transform_2(%arg0: i32) -> (i32, i32, i32) {
    %c0_i32 = arith.constant 0 : i32
    %c0_i32_0 = arith.constant 0 : i32
    %c0_i32_1 = arith.constant 0 : i32
    return %arg0, %c0_i32, %c0_i32_0 : i32, i32, i32
  }
  func.func @transform_3(%arg0: i32) -> (i32, i32) {
    %c0_i32 = arith.constant 0 : i32
    %c0_i32_0 = arith.constant 0 : i32
    %c0_i32_1 = arith.constant 0 : i32
    return %c0_i32, %c0_i32_0 : i32, i32
  }
  func.func @transform_4(%arg0: i32) -> (i32, i32) {
    %c0_i32 = arith.constant 0 : i32
    %c0_i32_0 = arith.constant 0 : i32
    %c0_i32_1 = arith.constant 0 : i32
    return %c0_i32, %c0_i32_0 : i32, i32
  }
  func.func @transform_5(%arg0: i32) -> (i32, i32) {
    %c0_i32 = arith.constant 0 : i32
    %c0_i32_0 = arith.constant 0 : i32
    %c0_i32_1 = arith.constant 0 : i32
    return %c0_i32, %c0_i32_0 : i32, i32
  }
  func.func @transform_6(%arg0: i32) -> (i32, i32) {
    %c0_i32 = arith.constant 0 : i32
    %c0_i32_0 = arith.constant 0 : i32
    %c0_i32_1 = arith.constant 0 : i32
    return %c0_i32, %c0_i32_0 : i32, i32
  }
  func.func @transform_7(%arg0: i32) -> (i32, i32) {
    %c0_i32 = arith.constant 0 : i32
    %c0_i32_0 = arith.constant 0 : i32
    %c0_i32_1 = arith.constant 0 : i32
    return %c0_i32, %c0_i32_0 : i32, i32
  }
  func.func @transform_8(%arg0: i32) -> (i32, i32) {
    %c0_i32 = arith.constant 0 : i32
    %c0_i32_0 = arith.constant 0 : i32
    %c0_i32_1 = arith.constant 0 : i32
    return %c0_i32, %c0_i32_0 : i32, i32
  }
  func.func @transform_9(%arg0: i32) -> (i32, i32, i32) {
    %c0_i32 = arith.constant 0 : i32
    %c0_i32_0 = arith.constant 0 : i32
    %c0_i32_1 = arith.constant 0 : i32
    return %arg0, %c0_i32, %c0_i32_0 : i32, i32, i32
  }
}

</mosaic_0001>

<llo_original>
// kernel: tpu_custom_call.1
$region0: #{tpu_custom_call.1}
  #allocation0 [shape = 'u32[]', space=smem, size = 0x4, offset = 0x4, fixed_abs, tag = 'smem constant byte address 0x4 - core index']
  #allocation1 [shape = 'u32[144,128]{1,0:T(1,128)}', space=vmem, size = 0x12000, scoped, tag = 'internal scratch']
  %s0 = inlined_call_operand.vmem [shape: f32[2,8,64], index: 0, kind: input, shape index: {}]
  %s1 = inlined_call_operand.hbm [shape: f32[2,8,16], index: 1, kind: input, shape index: {}]
  %s2 = inlined_call_operand.hbm [shape: f32[2,8,16], index: 2, kind: input, shape index: {}]
  %s3 = inlined_call_operand.vmem [shape: f32[1,64], index: 3, kind: input, shape index: {}]
  %s4 = inlined_call_operand.vmem [shape: f32[1,64], index: 4, kind: input, shape index: {}]
  %s5 = inlined_call_operand.vmem [shape: f32[64,128], index: 5, kind: input, shape index: {}]
  %s6 = inlined_call_operand.hbm [shape: f32[64,64], index: 6, kind: input, shape index: {}]
  %s7 = inlined_call_operand.vmem [shape: f32[64,256], index: 7, kind: input, shape index: {}]
  %s8 = inlined_call_operand.vmem [shape: f32[128,64], index: 8, kind: input, shape index: {}]
  %s9 = inlined_call_operand.hbm [shape: f32[2,8,64], index: 9, kind: output, shape index: {}]
  %s10 = sld [smem:[#allocation0]]
  $region81: #{tpu_custom_call.1} parent=0
    _
  %s12 = ssub.s32 1, %s10
  %s13 = scalar_select 0, %s12, %s10
  $region1: #{tpu_custom_call.1} parent=0
    #allocation2 [shape = 'u8[8192]{0}', space=vmem, size = 0x2000, scoped, tag = 'input window, operand 1']
    #allocation3 [shape = 's32[2]{0}', space=sflag, size = 0x8, scoped, tag = 'scoped memory for tpu_custom_call.1']
    #allocation4 [shape = 's32[2]{0}', space=sflag, size = 0x8, scoped, tag = 'scoped memory for tpu_custom_call.1']
    #allocation5 [shape = 'u8[8192]{0}', space=vmem, size = 0x2000, scoped, tag = 'input window, operand 2']
    #allocation6 [shape = 's32[2]{0}', space=sflag, size = 0x8, scoped, tag = 'scoped memory for tpu_custom_call.1']
    #allocation7 [shape = 'u8[32768]{0}', space=vmem, size = 0x8000, scoped, tag = 'input window, operand 6, single buffered']
    #allocation8 [shape = 'u8[8192]{0}', space=vmem, size = 0x2000, scoped, tag = 'output window, operand 0']
    %14 = vsyncpa [#allocation3], 0
    %s15 = scalar_lea.sflag [#allocation3], 1
    %16 = vsyncpa %s15, 0
    %17 = vsyncpa [#allocation6], 0
    %s18 = scalar_lea.sflag [#allocation6], 1
    %19 = vsyncpa %s18, 0
    %20 = vsyncpa [#allocation4], 0
    %s21 = scalar_lea.sflag [#allocation4], 1
    %22 = vsyncpa %s21, 0
    loop: start=0, step=1, limit=4
    $region2: #{tpu_custom_call.1} parent=1 // loop_pre_header
      _
    $region3: #{tpu_custom_call.1} parent=1 // loop_header
      %s24 = sphi 0, %s28
      %p25 = scmp.ge.s32.totalorder %s24, 4
      %s34 = sphi 0, %s36
      %s37 = sphi 0, %s34
      %s38 = sphi 0, %s37
      %s54 = sphi 0, %s38
      %s60 = sphi 0, %s62
      %s63 = sphi 0, %s60
      %s64 = sphi 0, %s63
      %s80 = sphi 0, %s64
      %s86 = sphi 0, %s88
      %s89 = sphi 0, %s86
      %s90 = sphi 0, %s89
      %s106 = sphi 0, %s90
      %s110 = sphi 0, %s110
      %s112 = sphi 0, %s110
      %s113 = sphi 0, %s112
      %s127 = sphi 0, %s113
      %s131 = sphi 0, %s131
      %s133 = sphi 0, %s131
      %s134 = sphi 0, %s133
      %s148 = sphi 0, %s134
      %s152 = sphi 0, %s152
      %s154 = sphi 0, %s152
      %s155 = sphi 0, %s154
      %s169 = sphi 0, %s155
      %s173 = sphi 0, %s173
      %s175 = sphi 0, %s173
      %s176 = sphi 0, %s175
      %s190 = sphi 0, %s176
      %s194 = sphi 0, %s194
      %s196 = sphi 0, %s194
      %s197 = sphi 0, %s196
      %s211 = sphi 0, %s197
      %s215 = sphi 0, %s215
      %s217 = sphi 0, %s215
      %s218 = sphi 0, %s217
      %s232 = sphi 0, %s218
      %s238 = sphi 0, %s240
      %s241 = sphi 0, %s238
      %s242 = sphi 0, %s241
      %s258 = sphi 0, %s242
    $region4: #{tpu_custom_call.1} parent=1 // loop_header_branch
      %27 = sbr.rel (%p25) target = $region8
    $region5: #{tpu_custom_call.1} parent=1 // loop_body
      %s29 = ssub.s32 %s24, 1
      %s30 = ssub.s32 %s24, 2
      %s31 = sadd.s32 %s24, 1
      %s32 = ssub.s32 %s24, %s31
      %p33 = scmp.eq.s32.totalorder %s32, 0
      %s35 = sadd.s32 %s34, 1
      %s36 = scalar_select %p33, %s34, %s35
      %p39 = pneg %p33
      %p40 = scmp.eq.s32.totalorder %s24, 1
      %p41 = por %p39, %p40
      %p42 = scmp.ne.s32.totalorder %s34, %s37
      %p43 = scmp.eq.s32.totalorder %s24, 0
      %p44 = por %p42, %p43
      %p45 = scmp.ne.s32.totalorder %s34, %s37
      %p46 = scmp.eq.s32.totalorder %s29, 1
      %p47 = por %p45, %p46
      %p48 = scmp.ne.s32.totalorder %s37, %s38
      %p49 = scmp.eq.s32.totalorder %s29, 0
      %p50 = por %p48, %p49
      %p51 = scmp.ne.s32.totalorder %s37, %s38
      %p52 = scmp.eq.s32.totalorder %s30, 1
      %p53 = por %p51, %p52
      %p55 = scmp.ne.s32.totalorder %s38, %s54
      %p56 = scmp.eq.s32.totalorder %s30, 0
      %p57 = por %p55, %p56
      %s58 = ssub.s32 %s24, %s31
      %p59 = scmp.eq.s32.totalorder %s58, 0
      %s61 = sadd.s32 %s60, 1
      %s62 = scalar_select %p59, %s60, %s61
      %p65 = pneg %p59
      %p66 = scmp.eq.s32.totalorder %s24, 1
      %p67 = por %p65, %p66
      %p68 = scmp.ne.s32.totalorder %s60, %s63
      %p69 = scmp.eq.s32.totalorder %s24, 0
      %p70 = por %p68, %p69
      %p71 = scmp.ne.s32.totalorder %s60, %s63
      %p72 = scmp.eq.s32.totalorder %s29, 1
      %p73 = por %p71, %p72
      %p74 = scmp.ne.s32.totalorder %s63, %s64
      %p75 = scmp.eq.s32.totalorder %s29, 0
      %p76 = por %p74, %p75
      %p77 = scmp.ne.s32.totalorder %s63, %s64
      %p78 = scmp.eq.s32.totalorder %s30, 1
      %p79 = por %p77, %p78
      %p81 = scmp.ne.s32.totalorder %s64, %s80
      %p82 = scmp.eq.s32.totalorder %s30, 0
      %p83 = por %p81, %p82
      %s84 = ssub.s32 %s24, %s31
      %p85 = scmp.eq.s32.totalorder %s84, 0
      %s87 = sadd.s32 %s86, 1
      %s88 = scalar_select %p85, %s86, %s87
      %p91 = pneg %p85
      %p92 = scmp.eq.s32.totalorder %s24, 1
      %p93 = por %p91, %p92
      %p94 = scmp.ne.s32.totalorder %s86, %s89
      %p95 = scmp.eq.s32.totalorder %s24, 0
      %p96 = por %p94, %p95
      %p97 = scmp.ne.s32.totalorder %s86, %s89
      %p98 = scmp.eq.s32.totalorder %s29, 1
      %p99 = por %p97, %p98
      %p100 = scmp.ne.s32.totalorder %s89, %s90
      %p101 = scmp.eq.s32.totalorder %s29, 0
      %p102 = por %p100, %p101
      %p103 = scmp.ne.s32.totalorder %s89, %s90
      %p104 = scmp.eq.s32.totalorder %s30, 1
      %p105 = por %p103, %p104
      %p107 = scmp.ne.s32.totalorder %s90, %s106
      %p108 = scmp.eq.s32.totalorder %s30, 0
      %p109 = por %p107, %p108
      %s111 = sadd.s32 %s110, 1
      %p114 = scmp.eq.s32.totalorder %s24, 1
      %p115 = scmp.ne.s32.totalorder %s110, %s112
      %p116 = scmp.eq.s32.totalorder %s24, 0
      %p117 = por %p115, %p116
      %p118 = scmp.ne.s32.totalorder %s110, %s112
      %p119 = scmp.eq.s32.totalorder %s29, 1
      %p120 = por %p118, %p119
      %p121 = scmp.ne.s32.totalorder %s112, %s113
      %p122 = scmp.eq.s32.totalorder %s29, 0
      %p123 = por %p121, %p122
      %p124 = scmp.ne.s32.totalorder %s112, %s113
      %p125 = scmp.eq.s32.totalorder %s30, 1
      %p126 = por %p124, %p125
      %p128 = scmp.ne.s32.totalorder %s113, %s127
      %p129 = scmp.eq.s32.totalorder %s30, 0
      %p130 = por %p128, %p129
      %s132 = sadd.s32 %s131, 1
      %p135 = scmp.eq.s32.totalorder %s24, 1
      %p136 = scmp.ne.s32.totalorder %s131, %s133
      %p137 = scmp.eq.s32.totalorder %s24, 0
      %p138 = por %p136, %p137
      %p139 = scmp.ne.s32.totalorder %s131, %s133
      %p140 = scmp.eq.s32.totalorder %s29, 1
      %p141 = por %p139, %p140
      %p142 = scmp.ne.s32.totalorder %s133, %s134
      %p143 = scmp.eq.s32.totalorder %s29, 0
      %p144 = por %p142, %p143
      %p145 = scmp.ne.s32.totalorder %s133, %s134
      %p146 = scmp.eq.s32.totalorder %s30, 1
      %p147 = por %p145, %p146
      %p149 = scmp.ne.s32.totalorder %s134, %s148
      %p150 = scmp.eq.s32.totalorder %s30, 0
      %p151 = por %p149, %p150
      %s153 = sadd.s32 %s152, 1
      %p156 = scmp.eq.s32.totalorder %s24, 1
      %p157 = scmp.ne.s32.totalorder %s152, %s154
      %p158 = scmp.eq.s32.totalorder %s24, 0
      %p159 = por %p157, %p158
      %p160 = scmp.ne.s32.totalorder %s152, %s154
      %p161 = scmp.eq.s32.totalorder %s29, 1
      %p162 = por %p160, %p161
      %p163 = scmp.ne.s32.totalorder %s154, %s155
      %p164 = scmp.eq.s32.totalorder %s29, 0
      %p165 = por %p163, %p164
      %p166 = scmp.ne.s32.totalorder %s154, %s155
      %p167 = scmp.eq.s32.totalorder %s30, 1
      %p168 = por %p166, %p167
      %p170 = scmp.ne.s32.totalorder %s155, %s169
      %p171 = scmp.eq.s32.totalorder %s30, 0
      %p172 = por %p170, %p171
      %s174 = sadd.s32 %s173, 1
      %p177 = scmp.eq.s32.totalorder %s24, 1
      %p178 = scmp.ne.s32.totalorder %s173, %s175
      %p179 = scmp.eq.s32.totalorder %s24, 0
      %p180 = por %p178, %p179
      %p181 = scmp.ne.s32.totalorder %s173, %s175
      %p182 = scmp.eq.s32.totalorder %s29, 1
      %p183 = por %p181, %p182
      %p184 = scmp.ne.s32.totalorder %s175, %s176
      %p185 = scmp.eq.s32.totalorder %s29, 0
      %p186 = por %p184, %p185
      %p187 = scmp.ne.s32.totalorder %s175, %s176
      %p188 = scmp.eq.s32.totalorder %s30, 1
      %p189 = por %p187, %p188
      %p191 = scmp.ne.s32.totalorder %s176, %s190
      %p192 = scmp.eq.s32.totalorder %s30, 0
      %p193 = por %p191, %p192
      %s195 = sadd.s32 %s194, 1
      %p198 = scmp.eq.s32.totalorder %s24, 1
      %p199 = scmp.ne.s32.totalorder %s194, %s196
      %p200 = scmp.eq.s32.totalorder %s24, 0
      %p201 = por %p199, %p200
      %p202 = scmp.ne.s32.totalorder %s194, %s196
      %p203 = scmp.eq.s32.totalorder %s29, 1
      %p204 = por %p202, %p203
      %p205 = scmp.ne.s32.totalorder %s196, %s197
      %p206 = scmp.eq.s32.totalorder %s29, 0
      %p207 = por %p205, %p206
      %p208 = scmp.ne.s32.totalorder %s196, %s197
      %p209 = scmp.eq.s32.totalorder %s30, 1
      %p210 = por %p208, %p209
      %p212 = scmp.ne.s32.totalorder %s197, %s211
      %p213 = scmp.eq.s32.totalorder %s30, 0
      %p214 = por %p212, %p213
      %s216 = sadd.s32 %s215, 1
      %p219 = scmp.eq.s32.totalorder %s24, 1
      %p220 = scmp.ne.s32.totalorder %s215, %s217
      %p221 = scmp.eq.s32.totalorder %s24, 0
      %p222 = por %p220, %p221
      %p223 = scmp.ne.s32.totalorder %s215, %s217
      %p224 = scmp.eq.s32.totalorder %s29, 1
      %p225 = por %p223, %p224
      %p226 = scmp.ne.s32.totalorder %s217, %s218
      %p227 = scmp.eq.s32.totalorder %s29, 0
      %p228 = por %p226, %p227
      %p229 = scmp.ne.s32.totalorder %s217, %s218
      %p230 = scmp.eq.s32.totalorder %s30, 1
      %p231 = por %p229, %p230
      %p233 = scmp.ne.s32.totalorder %s218, %s232
      %p234 = scmp.eq.s32.totalorder %s30, 0
      %p235 = por %p233, %p234
      %s236 = ssub.s32 %s24, %s31
      %p237 = scmp.eq.s32.totalorder %s236, 0
      %s239 = sadd.s32 %s238, 1
      %s240 = scalar_select %p237, %s238, %s239
      %p243 = pneg %p237
      %p244 = scmp.eq.s32.totalorder %s24, 1
      %p245 = por %p243, %p244
      %p246 = scmp.ne.s32.totalorder %s238, %s241
      %p247 = scmp.eq.s32.totalorder %s24, 0
      %p248 = por %p246, %p247
      %p249 = scmp.ne.s32.totalorder %s238, %s241
      %p250 = scmp.eq.s32.totalorder %s29, 1
      %p251 = por %p249, %p250
      %p252 = scmp.ne.s32.totalorder %s241, %s242
      %p253 = scmp.eq.s32.totalorder %s29, 0
      %p254 = por %p252, %p253
      %p255 = scmp.ne.s32.totalorder %s241, %s242
      %p256 = scmp.eq.s32.totalorder %s30, 1
      %p257 = por %p255, %p256
      %p259 = scmp.ne.s32.totalorder %s242, %s258
      %p260 = scmp.eq.s32.totalorder %s30, 0
      %p261 = por %p259, %p260
      %p262 = scmp.le.s32.totalorder 1, %s24
      %p263 = scmp.lt.s32.totalorder %s24, 3
      %p264 = pnand %p262, %p263
      %p265 = pneg %p264
      // Predicated region
      $region9: #{tpu_custom_call.1} parent=5 // pred_check
        _
      $region10: #{tpu_custom_call.1} parent=5 // pred_check_branch
        %267 = sbr.rel (%p264) target = $region12
      $region11: #{tpu_custom_call.1} parent=5 // pred_region
        %s268 = ssub.s32 %s24, 1
        // Predicated region
        $region13: #{tpu_custom_call.1} parent=11 // pred_check
          %p269 = pneg %p123
        $region14: #{tpu_custom_call.1} parent=11 // pred_check_branch
          %271 = sbr.rel (%p269) target = $region16
        $region15: #{tpu_custom_call.1} parent=11 // pred_region
          _
        $region16: #{tpu_custom_call.1} parent=11 // pred_fallthru
          _
        // Predicated region
        $region17: #{tpu_custom_call.1} parent=11 // pred_check
          %p272 = pneg %p144
        $region18: #{tpu_custom_call.1} parent=11 // pred_check_branch
          %274 = sbr.rel (%p272) target = $region20
        $region19: #{tpu_custom_call.1} parent=11 // pred_region
          _
        $region20: #{tpu_custom_call.1} parent=11 // pred_fallthru
          _
        // Predicated region
        $region21: #{tpu_custom_call.1} parent=11 // pred_check
          %p275 = pneg %p165
        $region22: #{tpu_custom_call.1} parent=11 // pred_check_branch
          %277 = sbr.rel (%p275) target = $region24
        $region23: #{tpu_custom_call.1} parent=11 // pred_region
          _
        $region24: #{tpu_custom_call.1} parent=11 // pred_fallthru
          _
        // Predicated region
        $region25: #{tpu_custom_call.1} parent=11 // pred_check
          %p278 = pneg %p186
        $region26: #{tpu_custom_call.1} parent=11 // pred_check_branch
          %280 = sbr.rel (%p278) target = $region28
        $region27: #{tpu_custom_call.1} parent=11 // pred_region
          %s282 = ssub.s32 1024, 1024
          %283 = vsyncadd [#allocation6], %s282
          %s284 = sshll.u32 [#allocation7], 4
          %s285 = int_to_ptr.vmem [resolvable:$true] %s284
          %290 = dma.hbm_to_vmem [thread:$0]  %s6, 1024, %s285, [#allocation6], 128, 128, 8
        $region28: #{tpu_custom_call.1} parent=11 // pred_fallthru
          _
        // Predicated region
        $region29: #{tpu_custom_call.1} parent=11 // pred_check
          %p291 = pneg %p207
        $region30: #{tpu_custom_call.1} parent=11 // pred_check_branch
          %293 = sbr.rel (%p291) target = $region32
        $region31: #{tpu_custom_call.1} parent=11 // pred_region
          _
        $region32: #{tpu_custom_call.1} parent=11 // pred_fallthru
          _
        // Predicated region
        $region33: #{tpu_custom_call.1} parent=11 // pred_check
          %p294 = pneg %p228
        $region34: #{tpu_custom_call.1} parent=11 // pred_check_branch
          %296 = sbr.rel (%p294) target = $region36
        $region35: #{tpu_custom_call.1} parent=11 // pred_region
          _
        $region36: #{tpu_custom_call.1} parent=11 // pred_fallthru
          _
      $region12: #{tpu_custom_call.1} parent=5 // pred_fallthru
        _
      %p297 = scmp.lt.s32.totalorder %s24, 2
      // Predicated region
      $region37: #{tpu_custom_call.1} parent=5 // pred_check
        %p298 = pneg %p297
      $region38: #{tpu_custom_call.1} parent=5 // pred_check_branch
        %300 = sbr.rel (%p298) target = $region40
      $region39: #{tpu_custom_call.1} parent=5 // pred_region
        // Predicated region
        $region41: #{tpu_custom_call.1} parent=39 // pred_check
          %p301 = pneg %p44
        $region42: #{tpu_custom_call.1} parent=39 // pred_check_branch
          %303 = sbr.rel (%p301) target = $region44
        $region43: #{tpu_custom_call.1} parent=39 // pred_region
          %p304 = scmp.lt.s32.totalorder %s24, 1
          %s305 = scalar_select %p304, %s24, 1
          %s306 = smul.addr %s305, 8
          %s307 = scalar_lea.vmem %s0, %s306
        $region44: #{tpu_custom_call.1} parent=39 // pred_fallthru
          _
        // Predicated region
        $region45: #{tpu_custom_call.1} parent=39 // pred_check
          %p308 = pneg %p70
        $region46: #{tpu_custom_call.1} parent=39 // pred_check_branch
          %310 = sbr.rel (%p308) target = $region48
        $region47: #{tpu_custom_call.1} parent=39 // pred_region
          %s311 = sand.u32 %s60, 1
          %s312 = scalar_lea.sflag [#allocation3], %s311
          %s313 = sand.u32 %s60, 1
          %s314 = smul.addr %s313, 8
          %s315 = scalar_lea.vmem [#allocation2], %s314
          %s317 = ssub.s32 128, 128
          %318 = vsyncadd %s312, %s317
          %s319 = smul.addr %s24, 128
          %s320 = scalar_lea.hbm %s1, %s319
          %s322 = sshll.u32 %s315, 4
          %s323 = int_to_ptr.vmem [resolvable:$true] %s322
          %325 = dma.hbm_to_vmem [thread:$0]  %s320, 128, %s323, %s312
        $region48: #{tpu_custom_call.1} parent=39 // pred_fallthru
          _
        // Predicated region
        $region49: #{tpu_custom_call.1} parent=39 // pred_check
          %p326 = pneg %p96
        $region50: #{tpu_custom_call.1} parent=39 // pred_check_branch
          %328 = sbr.rel (%p326) target = $region52
        $region51: #{tpu_custom_call.1} parent=39 // pred_region
          %s329 = sand.u32 %s24, 1
          %s330 = scalar_lea.sflag [#allocation6], %s329
          %s331 = sand.u32 %s86, 1
          %s332 = smul.addr %s331, 8
          %s333 = scalar_lea.vmem [#allocation5], %s332
          %s335 = ssub.s32 128, 128
          %336 = vsyncadd %s330, %s335
          %s337 = smul.addr %s24, 128
          %s338 = scalar_lea.hbm %s2, %s337
          %s340 = sshll.u32 %s333, 4
          %s341 = int_to_ptr.vmem [resolvable:$true] %s340
          %343 = dma.hbm_to_vmem [thread:$0]  %s338, 128, %s341, %s330
        $region52: #{tpu_custom_call.1} parent=39 // pred_fallthru
          _
      $region40: #{tpu_custom_call.1} parent=5 // pred_fallthru
        _
      %p344 = scmp.le.s32.totalorder 1, %s24
      %p345 = scmp.lt.s32.totalorder %s24, 3
      %p346 = pnand %p344, %p345
      %p347 = pneg %p346
      // Predicated region
      $region53: #{tpu_custom_call.1} parent=5 // pred_check
        _
      $region54: #{tpu_custom_call.1} parent=5 // pred_check_branch
        %349 = sbr.rel (%p346) target = $region56
      $region55: #{tpu_custom_call.1} parent=5 // pred_region
        %s350 = ssub.s32 %s24, 1
        %s351 = sand.u32 %s63, 1
        %s352 = scalar_lea.sflag [#allocation3], %s351
        %s353 = sand.u32 %s63, 1
        %s354 = smul.addr %s353, 8
        %s355 = scalar_lea.vmem [#allocation2], %s354
        // Predicated region
        $region57: #{tpu_custom_call.1} parent=55 // pred_check
          %p356 = pneg %p76
        $region58: #{tpu_custom_call.1} parent=55 // pred_check_branch
          %358 = sbr.rel (%p356) target = $region60
        $region59: #{tpu_custom_call.1} parent=55 // pred_region
          %359 = dma.done %s352, 128
        $region60: #{tpu_custom_call.1} parent=55 // pred_fallthru
          _
        %s360 = sand.u32 %s29, 1
        %s361 = scalar_lea.sflag [#allocation6], %s360
        %s362 = sand.u32 %s89, 1
        %s363 = smul.addr %s362, 8
        %s364 = scalar_lea.vmem [#allocation5], %s363
        // Predicated region
        $region61: #{tpu_custom_call.1} parent=55 // pred_check
          %p365 = pneg %p102
        $region62: #{tpu_custom_call.1} parent=55 // pred_check_branch
          %367 = sbr.rel (%p365) target = $region64
        $region63: #{tpu_custom_call.1} parent=55 // pred_region
          %368 = dma.done %s361, 128
        $region64: #{tpu_custom_call.1} parent=55 // pred_fallthru
          _
        // Predicated region
        $region65: #{tpu_custom_call.1} parent=55 // pred_check
          %p369 = pneg %p186
        $region66: #{tpu_custom_call.1} parent=55 // pred_check_branch
          %371 = sbr.rel (%p369) target = $region68
        $region67: #{tpu_custom_call.1} parent=55 // pred_region
          %372 = dma.done [#allocation6], 1024
        $region68: #{tpu_custom_call.1} parent=55 // pred_fallthru
          _
        %p373 = scmp.lt.s32.totalorder %s29, 1
        %s374 = scalar_select %p373, %s29, 1
        %s375 = smul.addr %s374, 8
        %s376 = scalar_lea.vmem %s0, %s375
        %p377 = pneg %p50
        %p378 = pneg %p47
        %s379 = sand.u32 %s63, 1
        %s380 = scalar_lea.sflag [#allocation3], %s379
        %s381 = sand.u32 %s63, 1
        %s382 = smul.addr %s381, 8
        %s383 = scalar_lea.vmem [#allocation2], %s382
        %p384 = pneg %p76
        %p385 = pneg %p73
        %s386 = sand.u32 %s29, 1
        %s387 = scalar_lea.sflag [#allocation6], %s386
        %s388 = sand.u32 %s89, 1
        %s389 = smul.addr %s388, 8
        %s390 = scalar_lea.vmem [#allocation5], %s389
        %p391 = pneg %p102
        %p392 = pneg %p99
        %p393 = pneg %p123
        %p394 = pneg %p120
        %p395 = pneg %p144
        %p396 = pneg %p141
        %p397 = pneg %p165
        %p398 = pneg %p162
        %p399 = pneg %p186
        %p400 = pneg %p183
        %p401 = pneg %p207
        %p402 = pneg %p204
        %p403 = pneg %p228
        %p404 = pneg %p225
        %p405 = pneg %p254
        %p406 = pneg %p251
        %s407 = sand.u32 %s241, 1
        %s408 = scalar_lea.sflag [#allocation4], %s407
        %s409 = sand.u32 %s241, 1
        %s410 = smul.addr %s409, 8
        %s411 = scalar_lea.vmem [#allocation8], %s410
        %p412 = scmp.lt.s32.totalorder %s29, 1
        %s413 = scalar_select %p412, %s29, 1
        %s414 = smul.addr %s413, 8
        %s415 = scalar_lea.vmem %s0, %s414
        %v416 = vld [vmem:[%s415] sm:$0xff]
        %v417 = vld [vmem:[%s355] sm:$0xff]
        %v418 = vld [vmem:[%s364] sm:$0xff]
        %v419 = vmul.f32 %v416, %v416
        %vm420 = vcmask 523264
        %v421 = vsel %vm420, %v419, 0.0
        %422 = vadd.xlane.f32.xlu0 %v421
        %v423 = vpop.xlane.xlu0 %422
        %v424 = vrcp.pop 64.0
        %v425 = vmul.f32 %v423, %v424
        %v426 = vadd.f32 %v425, 1e-06
        %v427 = vrsqrt.pop %v426
        %v428 = vmul.f32 %v416, %v427
        %v429 = vld [vmem:[%s3] sm:$0x1]
        %v431 = vlaneseq
        %v432 = vshrl.u32 %v431, 7
        %v433 = vsub.s32 0, %v432
        %v434 = vrot.slane %v429, %v433
        %v436 = vmul.f32 %v428, %v434
        %v437 = vld [vmem:[%s5] sm:$0xff]
        %v438 = vld [vmem:[%s5 + $0x8] sm:$0xff]
        %v439 = vld [vmem:[%s5 + $0x10] sm:$0xff]
        %v440 = vld [vmem:[%s5 + $0x18] sm:$0xff]
        %v441 = vld [vmem:[%s5 + $0x20] sm:$0xff]
        %v442 = vld [vmem:[%s5 + $0x28] sm:$0xff]
        %v443 = vld [vmem:[%s5 + $0x30] sm:$0xff]
        %v444 = vld [vmem:[%s5 + $0x38] sm:$0xff]
        %v446 = vsel %vm420, %v436, 0
        %448 = vmatprep.subr.mxu0 0.0
        %449 = vmatpush1.msra.mxu0 %v437
        %450 = vmatprep.subr.mxu0 0.0
        %451 = vmatpush1.msra.mxu0 %v438
        %452 = vmatprep.subr.mxu0 0.0
        %453 = vmatpush1.msra.mxu0 %v439
        %454 = vmatprep.subr.mxu0 0.0
        %455 = vmatpush1.msra.mxu0 %v440
        %456 = vmatprep.subr.mxu0 0.0
        %457 = vmatpush1.msra.mxu0 %v441
        %458 = vmatprep.subr.mxu0 0.0
        %459 = vmatpush1.msra.mxu0 %v442
        %460 = vmatprep.subr.mxu0 0.0
        %461 = vmatpush1.msra.mxu0 %v443
        %462 = vmatprep.subr.mxu0 0.0
        %463 = vmatpush1.msra.mxu0 %v444
        %464 = vmatprep.subr.mxu0 0.0
        %465 = vmatpush1.msra.mxu0 0.0
        %466 = vmatprep.subr.mxu0 0.0
        %467 = vmatpush1.msra.mxu0 0.0
        %468 = vmatprep.subr.mxu0 0.0
        %469 = vmatpush1.msra.mxu0 0.0
        %470 = vmatprep.subr.mxu0 0.0
        %471 = vmatpush1.msra.mxu0 0.0
        %472 = vmatprep.subr.mxu0 0.0
        %473 = vmatpush1.msra.mxu0 0.0
        %474 = vmatprep.subr.mxu0 0.0
        %475 = vmatpush1.msra.mxu0 0.0
        %476 = vmatprep.subr.mxu0 0.0
        %477 = vmatpush1.msra.mxu0 0.0
        %478 = vmatprep.subr.mxu0 0.0
        %479 = vmatpush1.msra.mxu0 0.0
        %480 = vmatprep.subr.mxu0 0.0
        %481 = vmatpush1.msra.mxu0 0.0
        %482 = vmatprep.subr.mxu0 0.0
        %483 = vmatpush1.msra.mxu0 0.0
        %484 = vmatprep.subr.mxu0 0.0
        %485 = vmatpush1.msra.mxu0 0.0
        %486 = vmatprep.subr.mxu0 0.0
        %487 = vmatpush1.msra.mxu0 0.0
        %488 = vmatprep.subr.mxu0 0.0
        %489 = vmatpush1.msra.mxu0 0.0
        %490 = vmatprep.subr.mxu0 0.0
        %491 = vmatpush1.msra.mxu0 0.0
        %492 = vmatprep.subr.mxu0 0.0
        %493 = vmatpush1.msra.mxu0 0.0
        %494 = vmatprep.subr.mxu0 0.0
        %495 = vmatpush1.msra.mxu0 0.0
        %496 = vmatprep.subr.mxu0 0.0
        %497 = vmatpush1.msra.mxu0 0.0
        %498 = vmatprep.subr.mxu0 0.0
        %499 = vmatpush1.msra.mxu0 0.0
        %500 = vmatprep.subr.mxu0 0.0
        %501 = vmatpush1.msra.mxu0 0.0
        %502 = vmatprep.subr.mxu0 0.0
        %503 = vmatpush1.msra.mxu0 0.0
        %504 = vmatprep.subr.mxu0 0.0
        %505 = vmatpush1.msra.mxu0 0.0
        %506 = vmatprep.subr.mxu0 0.0
        %507 = vmatpush1.msra.mxu0 0.0
        %508 = vmatprep.subr.mxu0 0.0
        %509 = vmatpush1.msra.mxu0 0.0
        %510 = vmatprep.subr.mxu0 0.0
        %511 = vmatpush1.msra.mxu0 0.0
        %512 = vmatprep.mubr.f32.mxu0 0.0
        %513 = vmatmul.mubr.f32.gmra.mrb[0].mxu0 %v446
        %v514 = vpop.f32.mrb[0].mxu0
        %v515 = vadd.f32 0.0, %v514
        %v516 = vpop.f32.mrb[0].mxu0
        %517 = vdwg.mxu0
        %v518 = vlaneseq
        %v519 = vand.u32 %v518, 127
        %vm520 = vcmp.lt.s32.totalorder %v519, 8
        %v521 = vsel %vm520, -1.0, 1.0
        %v522 = vmul.f32 %v521, %v418
        %v523 = vmul.f32 %v417, 0.25
        %v524 = vmul.f32 %v522, 0.25
        %v525 = vlaneseq
        %v526 = vshrl.u32 %v525, 7
        %v527 = vadd.s32 %v526, 8
        %vm528 = vcmp.lt.s32.totalorder %v526, 0
        %v529 = vsub.s32 0, %v526
        %v530 = vsel %vm528, %v529, %v526
        %v531 = vshrl.u32 %v530, 3
        %v532 = vand.u32 %v530, 7
        %v533 = vsub.s32 0, %v532
        %v534 = vsel %vm528, %v533, %v532
        %vm535 = vcmp.lt.s32.totalorder %v527, 0
        %v536 = vsub.s32 0, %v527
        %v537 = vsel %vm535, %v536, %v527
        %v538 = vshrl.u32 %v537, 3
        %v539 = vand.u32 %v537, 7
        %v540 = vsub.s32 0, %v539
        %v541 = vsel %vm535, %v540, %v539
        %vm542 = vcmp.ne.s32.totalorder %v534, 0
        %vm543 = vcmp.ne.s32.totalorder %v541, 0
        %vm544 = vcmp.lt.s32.totalorder %v534, 0
        %vm545 = vcmp.lt.s32.totalorder %v541, 0
        %vm546 = vmand %vm544, %vm542
        %vm547 = vmand %vm545, %vm543
        %v548 = vadd.s32 %v534, 8
        %v549 = vadd.s32 %v541, 8
        %v550 = vsel %vm546, %v548, %v534
        %v551 = vsel %vm547, %v549, %v541
        %vm552 = vcmp.le.s32.totalorder %v519, %v550
        %vm553 = vcmp.le.s32.totalorder %v519, %v551
        %555 = vrot.lane.b32.xlu0 %v417, 64
        %v556 = vpop.permute.xlu0 %555
        %v558 = vmul.f32 %v515, %v556
        %560 = vrot.lane.b32.xlu0 %v515, 64
        %v561 = vpop.permute.xlu0 %560
        %vm563 = vcmask 1047680
        %564 = vrot.lane.b32.xlu0 %v561, 16
        %v565 = vpop.permute.xlu0 %564
        %v566 = vsel %vm563, %v565, %v561
        %567 = vrot.lane.b32.xlu0 %v566, 16
        %v568 = vpop.permute.xlu0 %567
        %v569 = vsel %vm563, %v568, %v561
        %571 = vrot.lane.b32.xlu0 %v522, 8
        %v572 = vpop.permute.xlu0 %571
        %v574 = vmul.f32 %v569, %v572
        %576 = vrot.lane.b32.xlu0 %v574, 56
        %v577 = vpop.permute.xlu0 %576
        %v579 = vadd.f32 %v558, %v577
        %v580 = vmul.f32 %v515, %v523
        %581 = vrot.lane.b32.xlu0 %v515, 16
        %v582 = vpop.permute.xlu0 %581
        %v583 = vsel %vm563, %v582, %v515
        %584 = vrot.lane.b32.xlu0 %v583, 16
        %v585 = vpop.permute.xlu0 %584
        %v586 = vsel %vm563, %v585, %v515
        %588 = vrot.lane.b32.xlu0 %v524, 8
        %v589 = vpop.permute.xlu0 %588
        %v591 = vmul.f32 %v586, %v589
        %593 = vrot.lane.b32.xlu0 %v591, 120
        %v594 = vpop.permute.xlu0 %593
        %v596 = vadd.f32 %v580, %v594
        %598 = vrot.lane.b32.xlu0 %v523, 16
        %v599 = vpop.permute.xlu0 %598
        %v601 = vmul.f32 %v515, %v599
        %602 = vrot.lane.b32.xlu0 %v515, 112
        %v603 = vpop.permute.xlu0 %602
        %605 = vrot.lane.b32.xlu0 %v603, 16
        %v606 = vpop.permute.xlu0 %605
        %v607 = vsel %vm563, %v606, %v603
        %608 = vrot.lane.b32.xlu0 %v607, 16
        %v609 = vpop.permute.xlu0 %608
        %v610 = vsel %vm563, %v609, %v603
        %v611 = vmul.f32 %v610, %v589
        %613 = vrot.lane.b32.xlu0 %v611, 8
        %v614 = vpop.permute.xlu0 %613
        %v616 = vadd.f32 %v601, %v614
        %618 = vrot.lane.b32.xlu0 %v616, 112
        %v619 = vpop.permute.xlu0 %618
        %621 = vrot.lane.b32.xlu0 %v579, 64
        %v622 = vpop.permute.xlu0 %621
        %vm623 = vcmask 130048
        %v625 = vsel %vm623, %v596, 0
        %v627 = vsel %vm623, %v619, 0
        %v629 = vsel %vm623, %v622, 0
        %631 = vmatprep.subr.mxu0 0.0
        %632 = vmatpush1.xpose.msra.mxu0 %v629
        %633 = vmatprep.subr.mxu0 0.0
        %634 = vmatpush1.xpose.msra.mxu0 0.0
        %635 = vmatprep.subr.mxu0 0.0
        %636 = vmatpush1.xpose.msra.mxu0 0.0
        %637 = vmatprep.subr.mxu0 0.0
        %638 = vmatpush1.xpose.msra.mxu0 0.0
        %639 = vmatprep.subr.mxu0 0.0
        %640 = vmatpush1.xpose.msra.mxu0 0.0
        %641 = vmatprep.subr.mxu0 0.0
        %642 = vmatpush1.xpose.msra.mxu0 0.0
        %643 = vmatprep.subr.mxu0 0.0
        %644 = vmatpush1.xpose.msra.mxu0 0.0
        %645 = vmatprep.subr.mxu0 0.0
        %646 = vmatpush1.xpose.msra.mxu0 0.0
        %647 = vmatprep.subr.mxu0 0.0
        %648 = vmatpush1.xpose.msra.mxu0 0.0
        %649 = vmatprep.subr.mxu0 0.0
        %650 = vmatpush1.xpose.msra.mxu0 0.0
        %651 = vmatprep.subr.mxu0 0.0
        %652 = vmatpush1.xpose.msra.mxu0 0.0
        %653 = vmatprep.subr.mxu0 0.0
        %654 = vmatpush1.xpose.msra.mxu0 0.0
        %655 = vmatprep.subr.mxu0 0.0
        %656 = vmatpush1.xpose.msra.mxu0 0.0
        %657 = vmatprep.subr.mxu0 0.0
        %658 = vmatpush1.xpose.msra.mxu0 0.0
        %659 = vmatprep.subr.mxu0 0.0
        %660 = vmatpush1.xpose.msra.mxu0 0.0
        %661 = vmatprep.subr.mxu0 0.0
        %662 = vmatpush1.xpose.msra.mxu0 0.0
        %663 = vmatprep.subr.mxu0 0.0
        %664 = vmatpush1.xpose.msra.mxu0 0.0
        %665 = vmatprep.subr.mxu0 0.0
        %666 = vmatpush1.xpose.msra.mxu0 0.0
        %667 = vmatprep.subr.mxu0 0.0
        %668 = vmatpush1.xpose.msra.mxu0 0.0
        %669 = vmatprep.subr.mxu0 0.0
        %670 = vmatpush1.xpose.msra.mxu0 0.0
        %671 = vmatprep.subr.mxu0 0.0
        %672 = vmatpush1.xpose.msra.mxu0 0.0
        %673 = vmatprep.subr.mxu0 0.0
        %674 = vmatpush1.xpose.msra.mxu0 0.0
        %675 = vmatprep.subr.mxu0 0.0
        %676 = vmatpush1.xpose.msra.mxu0 0.0
        %677 = vmatprep.subr.mxu0 0.0
        %678 = vmatpush1.xpose.msra.mxu0 0.0
        %679 = vmatprep.subr.mxu0 0.0
        %680 = vmatpush1.xpose.msra.mxu0 0.0
        %681 = vmatprep.subr.mxu0 0.0
        %682 = vmatpush1.xpose.msra.mxu0 0.0
        %683 = vmatprep.subr.mxu0 0.0
        %684 = vmatpush1.xpose.msra.mxu0 0.0
        %685 = vmatprep.subr.mxu0 0.0
        %686 = vmatpush1.xpose.msra.mxu0 0.0
        %687 = vmatprep.subr.mxu0 0.0
        %688 = vmatpush1.xpose.msra.mxu0 0.0
        %689 = vmatprep.subr.mxu0 0.0
        %690 = vmatpush1.xpose.msra.mxu0 0.0
        %691 = vmatprep.subr.mxu0 0.0
        %692 = vmatpush1.xpose.msra.mxu0 0.0
        %693 = vmatprep.subr.mxu0 0.0
        %694 = vmatpush1.xpose.msra.mxu0 0.0
        %695 = vmatprep.mubr.f32.mxu0 0.0
        %696 = vmatmul.mubr.f32.gmra.mrb[0].mxu0 %v625
        %v697 = vpop.f32.mrb[0].mxu0
        %v698 = vadd.f32 0.0, %v697
        %v699 = vpop.f32.mrb[0].mxu0
        %700 = vmatprep.mubr.f32.mxu0 0.0
        %701 = vmatmul.mubr.f32.gmra.mrb[0].mxu0 %v627
        %v702 = vpop.f32.mrb[0].mxu0
        %v703 = vadd.f32 0.0, %v702
        %v704 = vpop.f32.mrb[0].mxu0
        %705 = vdwg.mxu0
        %v706 = vsel %vm552, %v698, -inf
        %v707 = vsel %vm553, %v703, -inf
        %vm708 = vcmask 64512
        %v709 = vsel %vm708, %v706, -inf
        %710 = vmax.xlane.f32.xlu0 %v709
        %v711 = vpop.xlane.xlu0 %710
        %v712 = vsel %vm708, %v707, -inf
        %713 = vmax.xlane.f32.xlu0 %v712
        %v714 = vpop.xlane.xlu0 %713
        %v715 = vsub.f32 %v706, %v711
        %v716 = vsub.f32 %v707, %v714
        %v717 = vmul.f32 %v715, 1.442695
        %v718 = vpow.pop %v717
        %v719 = vmul.f32 %v716, 1.442695
        %v720 = vpow.pop %v719
        %v721 = vsel %vm708, %v718, 0.0
        %722 = vadd.xlane.f32.xlu0 %v721
        %v723 = vpop.xlane.xlu0 %722
        %v724 = vsel %vm708, %v720, 0.0
        %725 = vadd.xlane.f32.xlu0 %v724
        %v726 = vpop.xlane.xlu0 %725
        %v727 = vrcp.pop %v723
        %v728 = vrcp.pop %v726
        %v729 = vmul.f32 %v718, %v727
        %v730 = vmul.f32 %v720, %v728
        %731 = vrot.lane.b32.xlu0 %v515, 32
        %v732 = vpop.permute.xlu0 %731
        %v735 = vsel %vm708, %v729, 0
        %v738 = vsel %vm708, %v730, 0
        %740 = vmatprep.subr.mxu0 0.0
        %741 = vmatpush1.msra.mxu0 %v732
        %742 = vmatprep.subr.mxu0 0.0
        %743 = vmatpush1.msra.mxu0 0.0
        %744 = vmatprep.subr.mxu0 0.0
        %745 = vmatpush1.msra.mxu0 0.0
        %746 = vmatprep.subr.mxu0 0.0
        %747 = vmatpush1.msra.mxu0 0.0
        %748 = vmatprep.subr.mxu0 0.0
        %749 = vmatpush1.msra.mxu0 0.0
        %750 = vmatprep.subr.mxu0 0.0
        %751 = vmatpush1.msra.mxu0 0.0
        %752 = vmatprep.subr.mxu0 0.0
        %753 = vmatpush1.msra.mxu0 0.0
        %754 = vmatprep.subr.mxu0 0.0
        %755 = vmatpush1.msra.mxu0 0.0
        %756 = vmatprep.subr.mxu0 0.0
        %757 = vmatpush1.msra.mxu0 0.0
        %758 = vmatprep.subr.mxu0 0.0
        %759 = vmatpush1.msra.mxu0 0.0
        %760 = vmatprep.subr.mxu0 0.0
        %761 = vmatpush1.msra.mxu0 0.0
        %762 = vmatprep.subr.mxu0 0.0
        %763 = vmatpush1.msra.mxu0 0.0
        %764 = vmatprep.subr.mxu0 0.0
        %765 = vmatpush1.msra.mxu0 0.0
        %766 = vmatprep.subr.mxu0 0.0
        %767 = vmatpush1.msra.mxu0 0.0
        %768 = vmatprep.subr.mxu0 0.0
        %769 = vmatpush1.msra.mxu0 0.0
        %770 = vmatprep.subr.mxu0 0.0
        %771 = vmatpush1.msra.mxu0 0.0
        %772 = vmatprep.subr.mxu0 0.0
        %773 = vmatpush1.msra.mxu0 0.0
        %774 = vmatprep.subr.mxu0 0.0
        %775 = vmatpush1.msra.mxu0 0.0
        %776 = vmatprep.subr.mxu0 0.0
        %777 = vmatpush1.msra.mxu0 0.0
        %778 = vmatprep.subr.mxu0 0.0
        %779 = vmatpush1.msra.mxu0 0.0
        %780 = vmatprep.subr.mxu0 0.0
        %781 = vmatpush1.msra.mxu0 0.0
        %782 = vmatprep.subr.mxu0 0.0
        %783 = vmatpush1.msra.mxu0 0.0
        %784 = vmatprep.subr.mxu0 0.0
        %785 = vmatpush1.msra.mxu0 0.0
        %786 = vmatprep.subr.mxu0 0.0
        %787 = vmatpush1.msra.mxu0 0.0
        %788 = vmatprep.subr.mxu0 0.0
        %789 = vmatpush1.msra.mxu0 0.0
        %790 = vmatprep.subr.mxu0 0.0
        %791 = vmatpush1.msra.mxu0 0.0
        %792 = vmatprep.subr.mxu0 0.0
        %793 = vmatpush1.msra.mxu0 0.0
        %794 = vmatprep.subr.mxu0 0.0
        %795 = vmatpush1.msra.mxu0 0.0
        %796 = vmatprep.subr.mxu0 0.0
        %797 = vmatpush1.msra.mxu0 0.0
        %798 = vmatprep.subr.mxu0 0.0
        %799 = vmatpush1.msra.mxu0 0.0
        %800 = vmatprep.subr.mxu0 0.0
        %801 = vmatpush1.msra.mxu0 0.0
        %802 = vmatprep.subr.mxu0 0.0
        %803 = vmatpush1.msra.mxu0 0.0
        %804 = vmatprep.mubr.f32.mxu0 0.0
        %805 = vmatmul.mubr.f32.gmra.mrb[0].mxu0 %v735
        %v806 = vpop.f32.mrb[0].mxu0
        %v807 = vadd.f32 0.0, %v806
        %v808 = vpop.f32.mrb[0].mxu0
        %809 = vmatprep.mubr.f32.mxu0 0.0
        %810 = vmatmul.mubr.f32.gmra.mrb[0].mxu0 %v738
        %v811 = vpop.f32.mrb[0].mxu0
        %v812 = vadd.f32 0.0, %v811
        %v813 = vpop.f32.mrb[0].mxu0
        %814 = vdwg.mxu0
        %815 = vrot.lane.b32.xlu0 %v417, 80
        %v816 = vpop.permute.xlu0 %815
        %v818 = vmul.f32 %v515, %v816
        %819 = vrot.lane.b32.xlu0 %v515, 48
        %v820 = vpop.permute.xlu0 %819
        %822 = vrot.lane.b32.xlu0 %v820, 16
        %v823 = vpop.permute.xlu0 %822
        %v824 = vsel %vm563, %v823, %v820
        %825 = vrot.lane.b32.xlu0 %v824, 16
        %v826 = vpop.permute.xlu0 %825
        %v827 = vsel %vm563, %v826, %v820
        %v828 = vmul.f32 %v827, %v572
        %830 = vrot.lane.b32.xlu0 %v828, 72
        %v831 = vpop.permute.xlu0 %830
        %v833 = vadd.f32 %v818, %v831
        %834 = vrot.lane.b32.xlu0 %v523, 32
        %v835 = vpop.permute.xlu0 %834
        %v837 = vmul.f32 %v515, %v835
        %838 = vrot.lane.b32.xlu0 %v515, 96
        %v839 = vpop.permute.xlu0 %838
        %841 = vrot.lane.b32.xlu0 %v839, 16
        %v842 = vpop.permute.xlu0 %841
        %v843 = vsel %vm563, %v842, %v839
        %844 = vrot.lane.b32.xlu0 %v843, 16
        %v845 = vpop.permute.xlu0 %844
        %v846 = vsel %vm563, %v845, %v839
        %v847 = vmul.f32 %v846, %v589
        %849 = vrot.lane.b32.xlu0 %v847, 24
        %v850 = vpop.permute.xlu0 %849
        %v852 = vadd.f32 %v837, %v850
        %853 = vrot.lane.b32.xlu0 %v523, 48
        %v854 = vpop.permute.xlu0 %853
        %v856 = vmul.f32 %v515, %v854
        %857 = vrot.lane.b32.xlu0 %v515, 80
        %v858 = vpop.permute.xlu0 %857
        %860 = vrot.lane.b32.xlu0 %v858, 16
        %v861 = vpop.permute.xlu0 %860
        %v862 = vsel %vm563, %v861, %v858
        %863 = vrot.lane.b32.xlu0 %v862, 16
        %v864 = vpop.permute.xlu0 %863
        %v865 = vsel %vm563, %v864, %v858
        %v866 = vmul.f32 %v865, %v589
        %868 = vrot.lane.b32.xlu0 %v866, 40
        %v869 = vpop.permute.xlu0 %868
        %v871 = vadd.f32 %v856, %v869
        %873 = vrot.lane.b32.xlu0 %v871, 112
        %v874 = vpop.permute.xlu0 %873
        %876 = vrot.lane.b32.xlu0 %v852, 96
        %v877 = vpop.permute.xlu0 %876
        %878 = vrot.lane.b32.xlu0 %v874, 96
        %v879 = vpop.permute.xlu0 %878
        %881 = vrot.lane.b32.xlu0 %v833, 48
        %v882 = vpop.permute.xlu0 %881
        %v883 = vsel %vm623, %v877, 0
        %v885 = vsel %vm623, %v879, 0
        %v887 = vsel %vm623, %v882, 0
        %889 = vmatprep.subr.mxu0 0.0
        %890 = vmatpush1.xpose.msra.mxu0 %v887
        %891 = vmatprep.subr.mxu0 0.0
        %892 = vmatpush1.xpose.msra.mxu0 0.0
        %893 = vmatprep.subr.mxu0 0.0
        %894 = vmatpush1.xpose.msra.mxu0 0.0
        %895 = vmatprep.subr.mxu0 0.0
        %896 = vmatpush1.xpose.msra.mxu0 0.0
        %897 = vmatprep.subr.mxu0 0.0
        %898 = vmatpush1.xpose.msra.mxu0 0.0
        %899 = vmatprep.subr.mxu0 0.0
        %900 = vmatpush1.xpose.msra.mxu0 0.0
        %901 = vmatprep.subr.mxu0 0.0
        %902 = vmatpush1.xpose.msra.mxu0 0.0
        %903 = vmatprep.subr.mxu0 0.0
        %904 = vmatpush1.xpose.msra.mxu0 0.0
        %905 = vmatprep.subr.mxu0 0.0
        %906 = vmatpush1.xpose.msra.mxu0 0.0
        %907 = vmatprep.subr.mxu0 0.0
        %908 = vmatpush1.xpose.msra.mxu0 0.0
        %909 = vmatprep.subr.mxu0 0.0
        %910 = vmatpush1.xpose.msra.mxu0 0.0
        %911 = vmatprep.subr.mxu0 0.0
        %912 = vmatpush1.xpose.msra.mxu0 0.0
        %913 = vmatprep.subr.mxu0 0.0
        %914 = vmatpush1.xpose.msra.mxu0 0.0
        %915 = vmatprep.subr.mxu0 0.0
        %916 = vmatpush1.xpose.msra.mxu0 0.0
        %917 = vmatprep.subr.mxu0 0.0
        %918 = vmatpush1.xpose.msra.mxu0 0.0
        %919 = vmatprep.subr.mxu0 0.0
        %920 = vmatpush1.xpose.msra.mxu0 0.0
        %921 = vmatprep.subr.mxu0 0.0
        %922 = vmatpush1.xpose.msra.mxu0 0.0
        %923 = vmatprep.subr.mxu0 0.0
        %924 = vmatpush1.xpose.msra.mxu0 0.0
        %925 = vmatprep.subr.mxu0 0.0
        %926 = vmatpush1.xpose.msra.mxu0 0.0
        %927 = vmatprep.subr.mxu0 0.0
        %928 = vmatpush1.xpose.msra.mxu0 0.0
        %929 = vmatprep.subr.mxu0 0.0
        %930 = vmatpush1.xpose.msra.mxu0 0.0
        %931 = vmatprep.subr.mxu0 0.0
        %932 = vmatpush1.xpose.msra.mxu0 0.0
        %933 = vmatprep.subr.mxu0 0.0
        %934 = vmatpush1.xpose.msra.mxu0 0.0
        %935 = vmatprep.subr.mxu0 0.0
        %936 = vmatpush1.xpose.msra.mxu0 0.0
        %937 = vmatprep.subr.mxu0 0.0
        %938 = vmatpush1.xpose.msra.mxu0 0.0
        %939 = vmatprep.subr.mxu0 0.0
        %940 = vmatpush1.xpose.msra.mxu0 0.0
        %941 = vmatprep.subr.mxu0 0.0
        %942 = vmatpush1.xpose.msra.mxu0 0.0
        %943 = vmatprep.subr.mxu0 0.0
        %944 = vmatpush1.xpose.msra.mxu0 0.0
        %945 = vmatprep.subr.mxu0 0.0
        %946 = vmatpush1.xpose.msra.mxu0 0.0
        %947 = vmatprep.subr.mxu0 0.0
        %948 = vmatpush1.xpose.msra.mxu0 0.0
        %949 = vmatprep.subr.mxu0 0.0
        %950 = vmatpush1.xpose.msra.mxu0 0.0
        %951 = vmatprep.subr.mxu0 0.0
        %952 = vmatpush1.xpose.msra.mxu0 0.0
        %953 = vmatprep.mubr.f32.mxu0 0.0
        %954 = vmatmul.mubr.f32.gmra.mrb[0].mxu0 %v883
        %v955 = vpop.f32.mrb[0].mxu0
        %v956 = vadd.f32 0.0, %v955
        %v957 = vpop.f32.mrb[0].mxu0
        %958 = vmatprep.mubr.f32.mxu0 0.0
        %959 = vmatmul.mubr.f32.gmra.mrb[0].mxu0 %v885
        %v960 = vpop.f32.mrb[0].mxu0
        %v961 = vadd.f32 0.0, %v960
        %v962 = vpop.f32.mrb[0].mxu0
        %963 = vdwg.mxu0
        %v964 = vsel %vm552, %v956, -inf
        %v965 = vsel %vm553, %v961, -inf
        %v966 = vsel %vm708, %v964, -inf
        %967 = vmax.xlane.f32.xlu0 %v966
        %v968 = vpop.xlane.xlu0 %967
        %v969 = vsel %vm708, %v965, -inf
        %970 = vmax.xlane.f32.xlu0 %v969
        %v971 = vpop.xlane.xlu0 %970
        %v972 = vsub.f32 %v964, %v968
        %v973 = vsub.f32 %v965, %v971
        %v974 = vmul.f32 %v972, 1.442695
        %v975 = vpow.pop %v974
        %v976 = vmul.f32 %v973, 1.442695
        %v977 = vpow.pop %v976
        %v978 = vsel %vm708, %v975, 0.0
        %979 = vadd.xlane.f32.xlu0 %v978
        %v980 = vpop.xlane.xlu0 %979
        %v981 = vsel %vm708, %v977, 0.0
        %982 = vadd.xlane.f32.xlu0 %v981
        %v983 = vpop.xlane.xlu0 %982
        %v984 = vrcp.pop %v980
        %v985 = vrcp.pop %v983
        %v986 = vmul.f32 %v975, %v984
        %v987 = vmul.f32 %v977, %v985
        %988 = vrot.lane.b32.xlu0 %v515, 16
        %v989 = vpop.permute.xlu0 %988
        %v992 = vsel %vm708, %v986, 0
        %v995 = vsel %vm708, %v987, 0
        %997 = vmatprep.subr.mxu0 0.0
        %998 = vmatpush1.msra.mxu0 %v989
        %999 = vmatprep.subr.mxu0 0.0
        %1000 = vmatpush1.msra.mxu0 0.0
        %1001 = vmatprep.subr.mxu0 0.0
        %1002 = vmatpush1.msra.mxu0 0.0
        %1003 = vmatprep.subr.mxu0 0.0
        %1004 = vmatpush1.msra.mxu0 0.0
        %1005 = vmatprep.subr.mxu0 0.0
        %1006 = vmatpush1.msra.mxu0 0.0
        %1007 = vmatprep.subr.mxu0 0.0
        %1008 = vmatpush1.msra.mxu0 0.0
        %1009 = vmatprep.subr.mxu0 0.0
        %1010 = vmatpush1.msra.mxu0 0.0
        %1011 = vmatprep.subr.mxu0 0.0
        %1012 = vmatpush1.msra.mxu0 0.0
        %1013 = vmatprep.subr.mxu0 0.0
        %1014 = vmatpush1.msra.mxu0 0.0
        %1015 = vmatprep.subr.mxu0 0.0
        %1016 = vmatpush1.msra.mxu0 0.0
        %1017 = vmatprep.subr.mxu0 0.0
        %1018 = vmatpush1.msra.mxu0 0.0
        %1019 = vmatprep.subr.mxu0 0.0
        %1020 = vmatpush1.msra.mxu0 0.0
        %1021 = vmatprep.subr.mxu0 0.0
        %1022 = vmatpush1.msra.mxu0 0.0
        %1023 = vmatprep.subr.mxu0 0.0
        %1024 = vmatpush1.msra.mxu0 0.0
        %1025 = vmatprep.subr.mxu0 0.0
        %1026 = vmatpush1.msra.mxu0 0.0
        %1027 = vmatprep.subr.mxu0 0.0
        %1028 = vmatpush1.msra.mxu0 0.0
        %1029 = vmatprep.subr.mxu0 0.0
        %1030 = vmatpush1.msra.mxu0 0.0
        %1031 = vmatprep.subr.mxu0 0.0
        %1032 = vmatpush1.msra.mxu0 0.0
        %1033 = vmatprep.subr.mxu0 0.0
        %1034 = vmatpush1.msra.mxu0 0.0
        %1035 = vmatprep.subr.mxu0 0.0
        %1036 = vmatpush1.msra.mxu0 0.0
        %1037 = vmatprep.subr.mxu0 0.0
        %1038 = vmatpush1.msra.mxu0 0.0
        %1039 = vmatprep.subr.mxu0 0.0
        %1040 = vmatpush1.msra.mxu0 0.0
        %1041 = vmatprep.subr.mxu0 0.0
        %1042 = vmatpush1.msra.mxu0 0.0
        %1043 = vmatprep.subr.mxu0 0.0
        %1044 = vmatpush1.msra.mxu0 0.0
        %1045 = vmatprep.subr.mxu0 0.0
        %1046 = vmatpush1.msra.mxu0 0.0
        %1047 = vmatprep.subr.mxu0 0.0
        %1048 = vmatpush1.msra.mxu0 0.0
        %1049 = vmatprep.subr.mxu0 0.0
        %1050 = vmatpush1.msra.mxu0 0.0
        %1051 = vmatprep.subr.mxu0 0.0
        %1052 = vmatpush1.msra.mxu0 0.0
        %1053 = vmatprep.subr.mxu0 0.0
        %1054 = vmatpush1.msra.mxu0 0.0
        %1055 = vmatprep.subr.mxu0 0.0
        %1056 = vmatpush1.msra.mxu0 0.0
        %1057 = vmatprep.subr.mxu0 0.0
        %1058 = vmatpush1.msra.mxu0 0.0
        %1059 = vmatprep.subr.mxu0 0.0
        %1060 = vmatpush1.msra.mxu0 0.0
        %1061 = vmatprep.mubr.f32.mxu0 0.0
        %1062 = vmatmul.mubr.f32.gmra.mrb[0].mxu0 %v992
        %v1063 = vpop.f32.mrb[0].mxu0
        %v1064 = vadd.f32 0.0, %v1063
        %v1065 = vpop.f32.mrb[0].mxu0
        %1066 = vmatprep.mubr.f32.mxu0 0.0
        %1067 = vmatmul.mubr.f32.gmra.mrb[0].mxu0 %v995
        %v1068 = vpop.f32.mrb[0].mxu0
        %v1069 = vadd.f32 0.0, %v1068
        %v1070 = vpop.f32.mrb[0].mxu0
        %1071 = vdwg.mxu0
        %1073 = vrot.lane.b32.xlu0 %v812, 16
        %v1074 = vpop.permute.xlu0 %1073
        %1077 = vrot.lane.b32.xlu0 %v1064, 32
        %v1078 = vpop.permute.xlu0 %1077
        %1081 = vrot.lane.b32.xlu0 %v1069, 48
        %v1082 = vpop.permute.xlu0 %1081
        %v1084 = vsel %vm623, %v807, %v1074
        %vm1085 = vcmask 261120
        %v1086 = vsel %vm1085, %v1084, %v1078
        %vm1087 = vcmask 392192
        %v1088 = vsel %vm1087, %v1086, %v1082
        %v1089 = vld [vmem:[#allocation7] sm:$0xff]
        %v1090 = vld [vmem:[#allocation7 + $0x8] sm:$0xff]
        %v1091 = vld [vmem:[#allocation7 + $0x10] sm:$0xff]
        %v1092 = vld [vmem:[#allocation7 + $0x18] sm:$0xff]
        %v1093 = vld [vmem:[#allocation7 + $0x20] sm:$0xff]
        %v1094 = vld [vmem:[#allocation7 + $0x28] sm:$0xff]
        %v1095 = vld [vmem:[#allocation7 + $0x30] sm:$0xff]
        %v1096 = vld [vmem:[#allocation7 + $0x38] sm:$0xff]
        %v1098 = vsel %vm420, %v1088, 0
        %1100 = vmatprep.subr.mxu0 0.0
        %1101 = vmatpush1.msra.mxu0 %v1089
        %1102 = vmatprep.subr.mxu0 0.0
        %1103 = vmatpush1.msra.mxu0 %v1090
        %1104 = vmatprep.subr.mxu0 0.0
        %1105 = vmatpush1.msra.mxu0 %v1091
        %1106 = vmatprep.subr.mxu0 0.0
        %1107 = vmatpush1.msra.mxu0 %v1092
        %1108 = vmatprep.subr.mxu0 0.0
        %1109 = vmatpush1.msra.mxu0 %v1093
        %1110 = vmatprep.subr.mxu0 0.0
        %1111 = vmatpush1.msra.mxu0 %v1094
        %1112 = vmatprep.subr.mxu0 0.0
        %1113 = vmatpush1.msra.mxu0 %v1095
        %1114 = vmatprep.subr.mxu0 0.0
        %1115 = vmatpush1.msra.mxu0 %v1096
        %1116 = vmatprep.subr.mxu0 0.0
        %1117 = vmatpush1.msra.mxu0 0.0
        %1118 = vmatprep.subr.mxu0 0.0
        %1119 = vmatpush1.msra.mxu0 0.0
        %1120 = vmatprep.subr.mxu0 0.0
        %1121 = vmatpush1.msra.mxu0 0.0
        %1122 = vmatprep.subr.mxu0 0.0
        %1123 = vmatpush1.msra.mxu0 0.0
        %1124 = vmatprep.subr.mxu0 0.0
        %1125 = vmatpush1.msra.mxu0 0.0
        %1126 = vmatprep.subr.mxu0 0.0
        %1127 = vmatpush1.msra.mxu0 0.0
        %1128 = vmatprep.subr.mxu0 0.0
        %1129 = vmatpush1.msra.mxu0 0.0
        %1130 = vmatprep.subr.mxu0 0.0
        %1131 = vmatpush1.msra.mxu0 0.0
        %1132 = vmatprep.subr.mxu0 0.0
        %1133 = vmatpush1.msra.mxu0 0.0
        %1134 = vmatprep.subr.mxu0 0.0
        %1135 = vmatpush1.msra.mxu0 0.0
        %1136 = vmatprep.subr.mxu0 0.0
        %1137 = vmatpush1.msra.mxu0 0.0
        %1138 = vmatprep.subr.mxu0 0.0
        %1139 = vmatpush1.msra.mxu0 0.0
        %1140 = vmatprep.subr.mxu0 0.0
        %1141 = vmatpush1.msra.mxu0 0.0
        %1142 = vmatprep.subr.mxu0 0.0
        %1143 = vmatpush1.msra.mxu0 0.0
        %1144 = vmatprep.subr.mxu0 0.0
        %1145 = vmatpush1.msra.mxu0 0.0
        %1146 = vmatprep.subr.mxu0 0.0
        %1147 = vmatpush1.msra.mxu0 0.0
        %1148 = vmatprep.subr.mxu0 0.0
        %1149 = vmatpush1.msra.mxu0 0.0
        %1150 = vmatprep.subr.mxu0 0.0
        %1151 = vmatpush1.msra.mxu0 0.0
        %1152 = vmatprep.subr.mxu0 0.0
        %1153 = vmatpush1.msra.mxu0 0.0
        %1154 = vmatprep.subr.mxu0 0.0
        %1155 = vmatpush1.msra.mxu0 0.0
        %1156 = vmatprep.subr.mxu0 0.0
        %1157 = vmatpush1.msra.mxu0 0.0
        %1158 = vmatprep.subr.mxu0 0.0
        %1159 = vmatpush1.msra.mxu0 0.0
        %1160 = vmatprep.subr.mxu0 0.0
        %1161 = vmatpush1.msra.mxu0 0.0
        %1162 = vmatprep.subr.mxu0 0.0
        %1163 = vmatpush1.msra.mxu0 0.0
        %1164 = vmatprep.mubr.f32.mxu0 0.0
        %1165 = vmatmul.mubr.f32.gmra.mrb[0].mxu0 %v1098
        %v1166 = vpop.f32.mrb[0].mxu0
        %v1167 = vadd.f32 0.0, %v1166
        %v1168 = vpop.f32.mrb[0].mxu0
        %1169 = vdwg.mxu0
        %v1170 = vadd.f32 %v416, %v1167
        %v1171 = vmul.f32 %v1170, %v1170
        %v1172 = vsel %vm420, %v1171, 0.0
        %1173 = vadd.xlane.f32.xlu0 %v1172
        %v1174 = vpop.xlane.xlu0 %1173
        %v1175 = vmul.f32 %v1174, %v424
        %v1176 = vadd.f32 %v1175, 1e-06
        %v1177 = vrsqrt.pop %v1176
        %v1178 = vmul.f32 %v1170, %v1177
        %v1179 = vld [vmem:[%s4] sm:$0x1]
        %v1181 = vlaneseq
        %v1182 = vshrl.u32 %v1181, 7
        %v1183 = vsub.s32 0, %v1182
        %v1184 = vrot.slane %v1179, %v1183
        %v1186 = vmul.f32 %v1178, %v1184
        %v1187 = vld [vmem:[%s7] sm:$0xff]
        %v1188 = vld [vmem:[%s7 + $0x8] sm:$0xff]
        %v1189 = vld [vmem:[%s7 + $0x10] sm:$0xff]
        %v1190 = vld [vmem:[%s7 + $0x18] sm:$0xff]
        %v1191 = vld [vmem:[%s7 + $0x20] sm:$0xff]
        %v1192 = vld [vmem:[%s7 + $0x28] sm:$0xff]
        %v1193 = vld [vmem:[%s7 + $0x30] sm:$0xff]
        %v1194 = vld [vmem:[%s7 + $0x38] sm:$0xff]
        %v1195 = vld [vmem:[%s7 + $0x40] sm:$0xff]
        %v1196 = vld [vmem:[%s7 + $0x48] sm:$0xff]
        %v1197 = vld [vmem:[%s7 + $0x50] sm:$0xff]
        %v1198 = vld [vmem:[%s7 + $0x58] sm:$0xff]
        %v1199 = vld [vmem:[%s7 + $0x60] sm:$0xff]
        %v1200 = vld [vmem:[%s7 + $0x68] sm:$0xff]
        %v1201 = vld [vmem:[%s7 + $0x70] sm:$0xff]
        %v1202 = vld [vmem:[%s7 + $0x78] sm:$0xff]
        %v1204 = vsel %vm420, %v1186, 0
        %1206 = vmatprep.subr.mxu0 %v1188
        %1207 = vmatpush1.msra.mxu0 %v1187
        %1208 = vmatprep.subr.mxu0 %v1190
        %1209 = vmatpush1.msra.mxu0 %v1189
        %1210 = vmatprep.subr.mxu0 %v1192
        %1211 = vmatpush1.msra.mxu0 %v1191
        %1212 = vmatprep.subr.mxu0 %v1194
        %1213 = vmatpush1.msra.mxu0 %v1193
        %1214 = vmatprep.subr.mxu0 %v1196
        %1215 = vmatpush1.msra.mxu0 %v1195
        %1216 = vmatprep.subr.mxu0 %v1198
        %1217 = vmatpush1.msra.mxu0 %v1197
        %1218 = vmatprep.subr.mxu0 %v1200
        %1219 = vmatpush1.msra.mxu0 %v1199
        %1220 = vmatprep.subr.mxu0 %v1202
        %1221 = vmatpush1.msra.mxu0 %v1201
        %1222 = vmatprep.subr.mxu0 0.0
        %1223 = vmatpush1.msra.mxu0 0.0
        %1224 = vmatprep.subr.mxu0 0.0
        %1225 = vmatpush1.msra.mxu0 0.0
        %1226 = vmatprep.subr.mxu0 0.0
        %1227 = vmatpush1.msra.mxu0 0.0
        %1228 = vmatprep.subr.mxu0 0.0
        %1229 = vmatpush1.msra.mxu0 0.0
        %1230 = vmatprep.subr.mxu0 0.0
        %1231 = vmatpush1.msra.mxu0 0.0
        %1232 = vmatprep.subr.mxu0 0.0
        %1233 = vmatpush1.msra.mxu0 0.0
        %1234 = vmatprep.subr.mxu0 0.0
        %1235 = vmatpush1.msra.mxu0 0.0
        %1236 = vmatprep.subr.mxu0 0.0
        %1237 = vmatpush1.msra.mxu0 0.0
        %1238 = vmatprep.subr.mxu0 0.0
        %1239 = vmatpush1.msra.mxu0 0.0
        %1240 = vmatprep.subr.mxu0 0.0
        %1241 = vmatpush1.msra.mxu0 0.0
        %1242 = vmatprep.subr.mxu0 0.0
        %1243 = vmatpush1.msra.mxu0 0.0
        %1244 = vmatprep.subr.mxu0 0.0
        %1245 = vmatpush1.msra.mxu0 0.0
        %1246 = vmatprep.subr.mxu0 0.0
        %1247 = vmatpush1.msra.mxu0 0.0
        %1248 = vmatprep.subr.mxu0 0.0
        %1249 = vmatpush1.msra.mxu0 0.0
        %1250 = vmatprep.subr.mxu0 0.0
        %1251 = vmatpush1.msra.mxu0 0.0
        %1252 = vmatprep.subr.mxu0 0.0
        %1253 = vmatpush1.msra.mxu0 0.0
        %1254 = vmatprep.subr.mxu0 0.0
        %1255 = vmatpush1.msra.mxu0 0.0
        %1256 = vmatprep.subr.mxu0 0.0
        %1257 = vmatpush1.msra.mxu0 0.0
        %1258 = vmatprep.subr.mxu0 0.0
        %1259 = vmatpush1.msra.mxu0 0.0
        %1260 = vmatprep.subr.mxu0 0.0
        %1261 = vmatpush1.msra.mxu0 0.0
        %1262 = vmatprep.subr.mxu0 0.0
        %1263 = vmatpush1.msra.mxu0 0.0
        %1264 = vmatprep.subr.mxu0 0.0
        %1265 = vmatpush1.msra.mxu0 0.0
        %1266 = vmatprep.subr.mxu0 0.0
        %1267 = vmatpush1.msra.mxu0 0.0
        %1268 = vmatprep.subr.mxu0 0.0
        %1269 = vmatpush1.msra.mxu0 0.0
        %1270 = vmatprep.mubr.f32.mxu0 0.0
        %1271 = vmatmul.mubr.f32.gmra.mrb[0].mxu0 %v1204
        %v1272 = vpop.f32.mrb[0].mxu0
        %v1273 = vadd.f32 0.0, %v1272
        %v1274 = vpop.f32.mrb[0].mxu0
        %v1275 = vadd.f32 0.0, %v1274
        %1276 = vdwg.mxu0
        %v1277 = vxor.u32 %v1273, 2147483648
        %v1278 = vmul.f32 %v1277, 1.442695
        %v1279 = vpow.pop %v1278
        %v1280 = vadd.f32 %v1279, 1.0
        %v1281 = vrcp.pop %v1280
        %v1282 = vmul.f32 1.0, %v1281
        %v1283 = vmul.f32 %v1273, %v1282
        %v1284 = vmul.f32 %v1283, %v1275
        %v1285 = vld [vmem:[%s8] sm:$0xff]
        %v1286 = vld [vmem:[%s8 + $0x8] sm:$0xff]
        %v1287 = vld [vmem:[%s8 + $0x10] sm:$0xff]
        %v1288 = vld [vmem:[%s8 + $0x18] sm:$0xff]
        %v1289 = vld [vmem:[%s8 + $0x20] sm:$0xff]
        %v1290 = vld [vmem:[%s8 + $0x28] sm:$0xff]
        %v1291 = vld [vmem:[%s8 + $0x30] sm:$0xff]
        %v1292 = vld [vmem:[%s8 + $0x38] sm:$0xff]
        %v1293 = vld [vmem:[%s8 + $0x40] sm:$0xff]
        %v1294 = vld [vmem:[%s8 + $0x48] sm:$0xff]
        %v1295 = vld [vmem:[%s8 + $0x50] sm:$0xff]
        %v1296 = vld [vmem:[%s8 + $0x58] sm:$0xff]
        %v1297 = vld [vmem:[%s8 + $0x60] sm:$0xff]
        %v1298 = vld [vmem:[%s8 + $0x68] sm:$0xff]
        %v1299 = vld [vmem:[%s8 + $0x70] sm:$0xff]
        %v1300 = vld [vmem:[%s8 + $0x78] sm:$0xff]
        %1301 = vmatprep.subr.mxu0 0.0
        %1302 = vmatpush1.msra.mxu0 %v1285
        %1303 = vmatprep.subr.mxu0 0.0
        %1304 = vmatpush1.msra.mxu0 %v1286
        %1305 = vmatprep.subr.mxu0 0.0
        %1306 = vmatpush1.msra.mxu0 %v1287
        %1307 = vmatprep.subr.mxu0 0.0
        %1308 = vmatpush1.msra.mxu0 %v1288
        %1309 = vmatprep.subr.mxu0 0.0
        %1310 = vmatpush1.msra.mxu0 %v1289
        %1311 = vmatprep.subr.mxu0 0.0
        %1312 = vmatpush1.msra.mxu0 %v1290
        %1313 = vmatprep.subr.mxu0 0.0
        %1314 = vmatpush1.msra.mxu0 %v1291
        %1315 = vmatprep.subr.mxu0 0.0
        %1316 = vmatpush1.msra.mxu0 %v1292
        %1317 = vmatprep.subr.mxu0 0.0
        %1318 = vmatpush1.msra.mxu0 %v1293
        %1319 = vmatprep.subr.mxu0 0.0
        %1320 = vmatpush1.msra.mxu0 %v1294
        %1321 = vmatprep.subr.mxu0 0.0
        %1322 = vmatpush1.msra.mxu0 %v1295
        %1323 = vmatprep.subr.mxu0 0.0
        %1324 = vmatpush1.msra.mxu0 %v1296
        %1325 = vmatprep.subr.mxu0 0.0
        %1326 = vmatpush1.msra.mxu0 %v1297
        %1327 = vmatprep.subr.mxu0 0.0
        %1328 = vmatpush1.msra.mxu0 %v1298
        %1329 = vmatprep.subr.mxu0 0.0
        %1330 = vmatpush1.msra.mxu0 %v1299
        %1331 = vmatprep.subr.mxu0 0.0
        %1332 = vmatpush1.msra.mxu0 %v1300
        %1333 = vmatprep.subr.mxu0 0.0
        %1334 = vmatpush1.msra.mxu0 0.0
        %1335 = vmatprep.subr.mxu0 0.0
        %1336 = vmatpush1.msra.mxu0 0.0
        %1337 = vmatprep.subr.mxu0 0.0
        %1338 = vmatpush1.msra.mxu0 0.0
        %1339 = vmatprep.subr.mxu0 0.0
        %1340 = vmatpush1.msra.mxu0 0.0
        %1341 = vmatprep.subr.mxu0 0.0
        %1342 = vmatpush1.msra.mxu0 0.0
        %1343 = vmatprep.subr.mxu0 0.0
        %1344 = vmatpush1.msra.mxu0 0.0
        %1345 = vmatprep.subr.mxu0 0.0
        %1346 = vmatpush1.msra.mxu0 0.0
        %1347 = vmatprep.subr.mxu0 0.0
        %1348 = vmatpush1.msra.mxu0 0.0
        %1349 = vmatprep.subr.mxu0 0.0
        %1350 = vmatpush1.msra.mxu0 0.0
        %1351 = vmatprep.subr.mxu0 0.0
        %1352 = vmatpush1.msra.mxu0 0.0
        %1353 = vmatprep.subr.mxu0 0.0
        %1354 = vmatpush1.msra.mxu0 0.0
        %1355 = vmatprep.subr.mxu0 0.0
        %1356 = vmatpush1.msra.mxu0 0.0
        %1357 = vmatprep.subr.mxu0 0.0
        %1358 = vmatpush1.msra.mxu0 0.0
        %1359 = vmatprep.subr.mxu0 0.0
        %1360 = vmatpush1.msra.mxu0 0.0
        %1361 = vmatprep.subr.mxu0 0.0
        %1362 = vmatpush1.msra.mxu0 0.0
        %1363 = vmatprep.subr.mxu0 0.0
        %1364 = vmatpush1.msra.mxu0 0.0
        %1365 = vmatprep.mubr.f32.mxu0 0.0
        %1366 = vmatmul.mubr.f32.gmra.mrb[0].mxu0 %v1284
        %v1367 = vpop.f32.mrb[0].mxu0
        %v1368 = vadd.f32 0.0, %v1367
        %v1369 = vpop.f32.mrb[0].mxu0
        %1370 = vdwg.mxu0
        %v1371 = vadd.f32 %v1170, %v1368
        %1372 = vst.msk [vmem:[%s411] sm:$0xff] %vm420, %v1371
        %s1373 = sand.u32 %s241, 1
        %s1374 = scalar_lea.sflag [#allocation4], %s1373
        %s1375 = sand.u32 %s241, 1
        %s1376 = smul.addr %s1375, 8
        %s1377 = scalar_lea.vmem [#allocation8], %s1376
        // Predicated region
        $region69: #{tpu_custom_call.1} parent=55 // pred_check
          %p1378 = pneg %p251
        $region70: #{tpu_custom_call.1} parent=55 // pred_check_branch
          %1380 = sbr.rel (%p1378) target = $region72
        $region71: #{tpu_custom_call.1} parent=55 // pred_region
          %s1382 = ssub.s32 128, 128
          %1383 = vsyncadd %s1374, %s1382
          %s1384 = smul.addr %s29, 128
          %s1385 = scalar_lea.hbm %s9, %s1384
          %s1387 = sshll.u32 %s1377, 4
          %s1388 = int_to_ptr.vmem [resolvable:$true] %s1387
          %1390 = dma.vmem_to_hbm [thread:$0]  %s1388, 128, %s1385, %s1374
        $region72: #{tpu_custom_call.1} parent=55 // pred_fallthru
          _
      $region56: #{tpu_custom_call.1} parent=5 // pred_fallthru
        _
      %p1391 = scmp.le.s32.totalorder 2, %s24
      // Predicated region
      $region73: #{tpu_custom_call.1} parent=5 // pred_check
        %p1392 = pneg %p1391
      $region74: #{tpu_custom_call.1} parent=5 // pred_check_branch
        %1394 = sbr.rel (%p1392) target = $region76
      $region75: #{tpu_custom_call.1} parent=5 // pred_region
        %s1395 = ssub.s32 %s24, 2
        // Predicated region
        $region77: #{tpu_custom_call.1} parent=75 // pred_check
          %p1396 = pneg %p257
        $region78: #{tpu_custom_call.1} parent=75 // pred_check_branch
          %1398 = sbr.rel (%p1396) target = $region80
        $region79: #{tpu_custom_call.1} parent=75 // pred_region
          %s1399 = sand.u32 %s242, 1
          %s1400 = scalar_lea.sflag [#allocation4], %s1399
          %s1401 = sand.u32 %s242, 1
          %s1402 = smul.addr %s1401, 8
          %s1403 = scalar_lea.vmem [#allocation8], %s1402
          %1404 = dma.done %s1400, 128
        $region80: #{tpu_custom_call.1} parent=75 // pred_fallthru
          _
      $region76: #{tpu_custom_call.1} parent=5 // pred_fallthru
        _
    $region6: #{tpu_custom_call.1} parent=1 // loop_footer
      %s28 = sadd.s32 1, %s24
    $region7: #{tpu_custom_call.1} parent=1 // loop_footer_branch
      %23 = sbr.rel target = $region3
    $region8: #{tpu_custom_call.1} parent=1 // loop_exit
      _
    %1405 = vsyncpa [#allocation3], 1
    %s1406 = scalar_lea.sflag [#allocation3], 1
    %1407 = vsyncpa %s1406, 1
    %1408 = vsyncpa [#allocation6], 1
    %s1409 = scalar_lea.sflag [#allocation6], 1
    %1410 = vsyncpa %s1409, 1
    %1411 = vsyncpa [#allocation4], 1
    %s1412 = scalar_lea.sflag [#allocation4], 1
    %1413 = vsyncpa %s1412, 1

</llo_original>
